<compile_context>
chip_gen: v7x
topology: tpu7x:2x2x1
jax: 0.10.0
libtpu: 0.0.40
codegen_flags: <defaults>
</compile_context>

<pallas_src>
import functools
import math

import jax
import jax.numpy as jnp
from jax.experimental import pallas as pl
from jax.experimental.pallas import tpu as pltpu


# ----------------------------- kernel 1: fused QKV projection -----------------------------
def _qkv_proj_kernel(x_ref, w_ref, qkv_ref):
    # x is already bf16 (cast in the wrapper): operands bf16, f32 accumulation.
    qkv_ref[0] = jnp.dot(x_ref[0], w_ref[...],
                         preferred_element_type=jnp.float32).astype(qkv_ref.dtype)


# ------------------- kernel 2: flash attention + fused output projection ------------------
def _flash_kernel(q_ref, k_ref, v_ref, wo_ref, bo_ref, o_ref,
                  m_sc, l_sc, acc_sc, out_sc,
                  *, scale: float, num_heads: int, tq: int, tkv: int):
    qi = pl.program_id(1)
    h = pl.program_id(2)
    ki = pl.program_id(3)
    n_kv = pl.num_programs(3)

    # Zero the output-projection accumulator once per (batch, q-tile).
    @pl.when(jnp.logical_and(h == 0, ki == 0))
    def _():
        out_sc[...] = jnp.zeros_like(out_sc)

    # Reset per-head online-softmax state at the start of each KV sweep.
    @pl.when(ki == 0)
    def _():
        m_sc[...] = jnp.full_like(m_sc, -1e30)
        l_sc[...] = jnp.zeros_like(l_sc)
        acc_sc[...] = jnp.zeros_like(acc_sc)

    # Causal skip: KV tiles strictly above the diagonal contribute nothing
    # (their DMA is also skipped via the clamped K/V index maps in the wrapper).
    @pl.when(ki * tkv <= qi * tq + (tq - 1))
    def _():
        q = q_ref[0]                                        # (tq,  hd) bf16
        k = k_ref[0]                                        # (tkv, hd) bf16
        v = v_ref[0]                                        # (tkv, hd) bf16

        # Q @ K^T via dot_general (no explicit transpose), f32 accumulate.
        s = jax.lax.dot_general(q, k, (((1,), (1,)), ((), ())),
                                preferred_element_type=jnp.float32) * scale

        # Apply the causal mask only on diagonal-straddling tiles; interior
        # (fully below-diagonal) tiles skip all iota/compare/select VPU work.
        offset = ki * tkv - qi * tq                          # scalar int32

        def _apply_mask(sv):
            rel = (jax.lax.broadcasted_iota(jnp.int32, (tq, tkv), 0)
                   - jax.lax.broadcasted_iota(jnp.int32, (tq, tkv), 1))
            return jnp.where(rel >= offset, sv, -1e30)       # keep where col <= row

        s = jax.lax.cond(ki * tkv + (tkv - 1) > qi * tq,
                         _apply_mask, lambda sv: sv, s)

        m_prev = m_sc[...]
        m_new = jnp.maximum(m_prev, jnp.max(s, axis=-1, keepdims=True))
        alpha = jnp.exp(m_prev - m_new)
        p = jnp.exp(s - m_new)
        l_sc[...] = alpha * l_sc[...] + jnp.sum(p, axis=-1, keepdims=True)
        acc_sc[...] = alpha * acc_sc[...] + jnp.dot(
            p.astype(jnp.bfloat16), v, preferred_element_type=jnp.float32)
        m_sc[...] = m_new

    # Finalize this head: normalize and fold its slice of the output projection in.
    @pl.when(ki == n_kv - 1)
    def _():
        ctx = acc_sc[...] * pl.reciprocal(l_sc[...], approx=True)   # (tq, hd)
        out_sc[...] += jnp.dot(ctx.astype(jnp.bfloat16), wo_ref[0],
                               preferred_element_type=jnp.float32)

    # Last head, last KV tile: one lane-dense (tq, d_out) store (+ bias).
    @pl.when(jnp.logical_and(h == num_heads - 1, ki == n_kv - 1))
    def _():
        o_ref[0] = (out_sc[...] + bo_ref[...]).astype(o_ref.dtype)


# ------------------------------------- wrapper --------------------------------------------
def _pick_weight_n_tile(d_in: int, n_total: int, limit_bytes: int = 8 * 1024 * 1024) -> int:
    """Largest 128-multiple divisor of n_total whose (d_in, n) bf16 block fits the budget."""
    if d_in * n_total * 2 <= limit_bytes:
        return n_total
    best = 128
    cand = 128
    while cand <= n_total:
        if n_total % cand == 0 and d_in * cand * 2 <= limit_bytes:
            best = cand
        cand += 128
    return best


def multi_head_attention(x, w_q, w_k, w_v, w_o, b_o, *, num_heads: int,
                         tq: int = 256, tkv: int = 256, proj_tile: int = 256):
    """x: (B, T, d_in); w_q/w_k/w_v: (d_in, d_out); w_o: (d_out, d_out); b_o: (1, d_out)."""
    B, T, d_in = x.shape
    d_out = w_q.shape[1]
    assert d_out % num_heads == 0, "d_out must be divisible by num_heads"
    head_dim = d_out // num_heads
    assert head_dim % 128 == 0, "optimized path requires head_dim % 128 == 0 (lane width)"
    tq = min(tq, T)
    tkv = min(tkv, T)
    proj_tile = min(proj_tile, T)
    assert T % tq == 0 and T % tkv == 0 and T % proj_tile == 0, "T must tile evenly"

    # ---- 1) fused QKV projection: bf16 x, bf16 [W_q|W_k|W_v], optional N-axis split ----
    x_bf = x.astype(jnp.bfloat16)                                          # halve x DMA
    w_qkv = jnp.concatenate([w_q, w_k, w_v], axis=1).astype(jnp.bfloat16)  # (d_in, 3*d_out)
    n3 = 3 * d_out
    wn = _pick_weight_n_tile(d_in, n3)

    qkv = pl.pallas_call(
        _qkv_proj_kernel,
        out_shape=jax.ShapeDtypeStruct((B, T, n3), jnp.bfloat16),
        grid_spec=pltpu.PrefetchScalarGridSpec(
            num_scalar_prefetch=0,
            grid=(B, T // proj_tile, n3 // wn),
            in_specs=[
                pl.BlockSpec((1, proj_tile, d_in), lambda b, i, j: (b, i, 0)),
                pl.BlockSpec((d_in, wn), lambda b, i, j: (0, j)),
            ],
            out_specs=pl.BlockSpec((1, proj_tile, wn), lambda b, i, j: (b, i, j)),
        ),
        compiler_params=pltpu.CompilerParams(
            dimension_semantics=("parallel", "parallel", "parallel"),
            vmem_limit_bytes=32 * 1024 * 1024),
    )(x_bf, w_qkv)

    # ---- 2) flash attention + fused output projection ----
    w_o_h = w_o.reshape(num_heads, head_dim, d_out).astype(jnp.bfloat16)
    b_o2 = b_o.reshape(1, d_out).astype(jnp.float32)

    nh = num_heads
    # Clamp K/V block indices to the last causally-valid block, so above-diagonal
    # (pl.when-skipped) tiles don't trigger a fresh HBM->VMEM DMA.
    last_valid = lambda qi: (qi * tq + (tq - 1)) // tkv

    kernel = functools.partial(_flash_kernel, scale=1.0 / math.sqrt(head_dim),
                               num_heads=num_heads, tq=tq, tkv=tkv)

    out = pl.pallas_call(
        kernel,
        out_shape=jax.ShapeDtypeStruct((B, T, d_out), x.dtype),
        grid_spec=pltpu.PrefetchScalarGridSpec(
            num_scalar_prefetch=0,
            grid=(B, T // tq, num_heads, T // tkv),
            in_specs=[
                # per-head Q / K / V tiles picked directly out of the fused qkv array
                pl.BlockSpec((1, tq, head_dim),
                             lambda b, qi, h, ki: (b, qi, h)),
                pl.BlockSpec((1, tkv, head_dim),
                             lambda b, qi, h, ki: (b, jnp.minimum(ki, last_valid(qi)), nh + h)),
                pl.BlockSpec((1, tkv, head_dim),
                             lambda b, qi, h, ki: (b, jnp.minimum(ki, last_valid(qi)), 2 * nh + h)),
                # per-head slice of the output projection weight (grid-invariant across qi/ki)
                pl.BlockSpec((1, head_dim, d_out), lambda b, qi, h, ki: (h, 0, 0)),
                pl.BlockSpec((1, d_out), lambda b, qi, h, ki: (0, 0)),
            ],
            out_specs=pl.BlockSpec((1, tq, d_out), lambda b, qi, h, ki: (b, qi, 0)),
            scratch_shapes=[
                pltpu.VMEM((tq, 1), jnp.float32),         # m: running max
                pltpu.VMEM((tq, 1), jnp.float32),         # l: running denominator
                pltpu.VMEM((tq, head_dim), jnp.float32),  # per-head context accumulator
                pltpu.VMEM((tq, d_out), jnp.float32),     # output-projection accumulator
            ]),
        compiler_params=pltpu.CompilerParams(
            dimension_semantics=("parallel", "parallel", "arbitrary", "arbitrary"),
            vmem_limit_bytes=32 * 1024 * 1024),
    )(qkv, qkv, qkv, w_o_h, b_o2)
    return out


# ------------------------------------ reference --------------------------------------------
def _reference(x, w_q, w_k, w_v, w_o, b_o, num_heads):
    """Pure-JAX f32 reference mirroring the PyTorch forward (eval mode)."""
    B, T, _ = x.shape
    d_out = w_q.shape[1]
    hd = d_out // num_heads
    q = (x @ w_q).reshape(B, T, num_heads, hd).transpose(0, 2, 1, 3)
    k = (x @ w_k).reshape(B, T, num_heads, hd).transpose(0, 2, 1, 3)
    v = (x @ w_v).reshape(B, T, num_heads, hd).transpose(0, 2, 1, 3)
    scores = jnp.einsum("bhqd,bhkd->bhqk", q, k) / (hd ** 0.5)
    mask = jnp.triu(jnp.ones((T, T), dtype=bool), k=1)
    scores = jnp.where(mask[None, None], -jnp.inf, scores)
    w = jax.nn.softmax(scores, axis=-1)
    ctx = jnp.einsum("bhqk,bhkd->bhqd", w, v).transpose(0, 2, 1, 3).reshape(B, T, d_out)
    return ctx @ w_o + b_o


if __name__ == "__main__":
    # Small but TPU-tile-friendly shapes (128-aligned head_dim / d_out).
    B, T, D_IN, NUM_HEADS, HEAD_DIM = 2, 256, 128, 2, 128
    D_OUT = NUM_HEADS * HEAD_DIM

    key = jax.random.PRNGKey(0)
    kx, kq, kk, kv, ko, kb = jax.random.split(key, 6)

    s_in = 1.0 / (D_IN ** 0.5)
    s_out = 1.0 / (D_OUT ** 0.5)
    x = jax.random.normal(kx, (B, T, D_IN), dtype=jnp.float32)
    w_q = jax.random.uniform(kq, (D_IN, D_OUT), jnp.float32, -s_in, s_in)
    w_k = jax.random.uniform(kk, (D_IN, D_OUT), jnp.float32, -s_in, s_in)
    w_v = jax.random.uniform(kv, (D_IN, D_OUT), jnp.float32, -s_in, s_in)
    w_o = jax.random.uniform(ko, (D_OUT, D_OUT), jnp.float32, -s_out, s_out)
    b_o = jax.random.uniform(kb, (1, D_OUT), jnp.float32, -s_out, s_out)

    out = multi_head_attention(x, w_q, w_k, w_v, w_o, b_o, num_heads=NUM_HEADS)
    out = jax.block_until_ready(out)

    ref = _reference(x, w_q, w_k, w_v, w_o, b_o, NUM_HEADS)
    assert out.shape == (B, T, D_OUT)
    max_err = float(jnp.max(jnp.abs(out - ref)))
    # bf16 QKV intermediate + approx reciprocal => bf16-level tolerance.
    assert jnp.allclose(out, ref, atol=4e-2, rtol=4e-2), f"mismatch vs reference (max_err={max_err})"

    print("KERNEL_OK")
</pallas_src>

<mosaic_0001>
module attributes {stable_mosaic.version = 11 : i64} {
  func.func @_qkv_proj_kernel(%arg0: i32, %arg1: i32, %arg2: i32, %arg3: memref<1x256x128xbf16, #tpu.memory_space<vmem>>, %arg4: memref<128x768xbf16, #tpu.memory_space<vmem>>, %arg5: memref<1x256x768xbf16, #tpu.memory_space<vmem>>) attributes {dimension_semantics = [#tpu.dimension_semantics<parallel>, #tpu.dimension_semantics<parallel>, #tpu.dimension_semantics<parallel>], iteration_bounds = array<i64: 2, 1, 1>, scalar_prefetch = 0 : i64, scratch_operands = 0 : i64, tpu.core_type = #tpu.core_type<tc>, window_params = [{transform_indices = @transform_0, window_bounds = array<i64: 1, 256, 128>}, {transform_indices = @transform_1, window_bounds = array<i64: 128, 768>}, {transform_indices = @transform_2, window_bounds = array<i64: 1, 256, 768>}]} {
    %c0 = arith.constant 0 : index
    %c0_0 = arith.constant 0 : index
    %c0_1 = arith.constant 0 : index
    %0 = vector.load %arg3[%c0, %c0_0, %c0_1] : memref<1x256x128xbf16, #tpu.memory_space<vmem>>, vector<1x256x128xbf16>
    %1 = vector.shape_cast %0 : vector<1x256x128xbf16> to vector<256x128xbf16>
    %c0_2 = arith.constant 0 : index
    %c0_3 = arith.constant 0 : index
    %2 = vector.load %arg4[%c0_2, %c0_3] : memref<128x768xbf16, #tpu.memory_space<vmem>>, vector<128x768xbf16>
    %cst = arith.constant dense<0.000000e+00> : vector<256x768xf32>
    %3 = tpu.matmul %1, %2, %cst {dimension_numbers = #tpu.dot_dimension_numbers<[1], [0], [0], [1], [0, 0, 1, 1], [], []>} : vector<256x128xbf16>, vector<128x768xbf16>, vector<256x768xf32> -> vector<256x768xf32>
    %4 = arith.truncf %3 : vector<256x768xf32> to vector<256x768xbf16>
    %c0_4 = arith.constant 0 : index
    %c0_5 = arith.constant 0 : index
    %c0_6 = arith.constant 0 : index
    %5 = vector.load %arg5[%c0_4, %c0_5, %c0_6] : memref<1x256x768xbf16, #tpu.memory_space<vmem>>, vector<1x256x768xbf16>
    %6 = vector.shape_cast %5 : vector<1x256x768xbf16> to vector<256x768xbf16>
    %7 = vector.shape_cast %4 : vector<256x768xbf16> to vector<1x256x768xbf16>
    tpu.vector_store %arg5[%c0_4, %c0_5, %c0_6], %7 {strides = array<i32>} : memref<1x256x768xbf16, #tpu.memory_space<vmem>>, vector<1x256x768xbf16>,
    return
  }
  func.func @transform_0(%arg0: i32, %arg1: i32, %arg2: i32) -> (i32, i32, i32) {
    %c0_i32 = arith.constant 0 : i32
    %c0_i32_0 = arith.constant 0 : i32
    return %arg0, %arg1, %c0_i32 : i32, i32, i32
  }
  func.func @transform_1(%arg0: i32, %arg1: i32, %arg2: i32) -> (i32, i32) {
    %c0_i32 = arith.constant 0 : i32
    %c0_i32_0 = arith.constant 0 : i32
    return %c0_i32, %arg2 : i32, i32
  }
  func.func @transform_2(%arg0: i32, %arg1: i32, %arg2: i32) -> (i32, i32, i32) {
    %c0_i32 = arith.constant 0 : i32
    return %arg0, %arg1, %arg2 : i32, i32, i32
  }
}

</mosaic_0001>

<llo_original>
// kernel: tpu_custom_call.1
$region0: #{tpu_custom_call.1}
  #allocation0 [shape = 'u32[]', space=smem, size = 0x4, offset = 0x4, fixed_abs, tag = 'smem constant byte address 0x4 - core index']
  #allocation1 [shape = 'u32[144,128]{1,0:T(1,128)}', space=vmem, size = 0x12000, scoped, tag = 'internal scratch']
  %s0 = inlined_call_operand.hbm [shape: bf16[2,256,128], index: 0, kind: input, shape index: {}]
  %s1 = inlined_call_operand.hbm [shape: bf16[128,768], index: 1, kind: input, shape index: {}]
  %s2 = inlined_call_operand.hbm [shape: bf16[2,256,768], index: 2, kind: output, shape index: {}]
  %s3 = sld [smem:[#allocation0]]
  $region49: #{tpu_custom_call.1} parent=0
    _
  %s5 = ssub.s32 1, %s3
  %s6 = scalar_select 0, %s5, %s3
  $region1: #{tpu_custom_call.1} parent=0
    #allocation2 [shape = 'u8[131072]{0}', space=vmem, size = 0x20000, scoped, tag = 'input window, operand 0']
    #allocation3 [shape = 's32[2]{0}', space=sflag, size = 0x8, scoped, tag = 'scoped memory for tpu_custom_call.1']
    #allocation4 [shape = 's32[2]{0}', space=sflag, size = 0x8, scoped, tag = 'scoped memory for tpu_custom_call.1']
    #allocation5 [shape = 'u8[196608]{0}', space=vmem, size = 0x30000, scoped, tag = 'input window, operand 1, single buffered']
    #allocation6 [shape = 's32[1]{0}', space=sflag, size = 0x4, scoped, tag = 'scoped memory for tpu_custom_call.1']
    #allocation7 [shape = 'u8[786432]{0}', space=vmem, size = 0xc0000, scoped, tag = 'output window, operand 0']
    %7 = vsyncpa [#allocation3], 0
    %s8 = scalar_lea.sflag [#allocation3], 1
    %9 = vsyncpa %s8, 0
    %10 = vsyncpa [#allocation6], 0
    %11 = vsyncpa [#allocation4], 0
    %s12 = scalar_lea.sflag [#allocation4], 1
    %13 = vsyncpa %s12, 0
    loop: start=0, step=1, limit=4
    $region2: #{tpu_custom_call.1} parent=1 // loop_pre_header
      _
    $region3: #{tpu_custom_call.1} parent=1 // loop_header
      %s15 = sphi 0, %s19
      %p16 = scmp.ge.s32.totalorder %s15, 4
      %s22 = sphi 0, %s41
      %s23 = sphi 0, %s37
      %s24 = sphi 0, %s33
      %s25 = sphi 0, %s22
      %s26 = sphi 0, %s23
      %s27 = sphi 0, %s24
      %s28 = sphi 0, %s25
      %s29 = sphi 0, %s26
      %s30 = sphi 0, %s27
      %s46 = sphi 0, %s48
      %s49 = sphi 0, %s46
      %s50 = sphi 0, %s49
      %s66 = sphi 0, %s50
      %s72 = sphi 0, %s74
      %s75 = sphi 0, %s72
      %s76 = sphi 0, %s75
      %s92 = sphi 0, %s76
      %s102 = sphi 0, %s104
      %s105 = sphi 0, %s102
      %s106 = sphi 0, %s105
      %s122 = sphi 0, %s106
    $region4: #{tpu_custom_call.1} parent=1 // loop_header_branch
      %18 = sbr.rel (%p16) target = $region8
    $region5: #{tpu_custom_call.1} parent=1 // loop_body
      %s20 = ssub.s32 %s15, 1
      %s21 = ssub.s32 %s15, 2
      %s31 = sadd.s32 1, %s24
      %p32 = scmp.ge.s32.totalorder %s31, 1
      %s33 = scalar_select %p32, 0, %s31
      %s34 = sadd.s32 1, %s23
      %s35 = scalar_select %p32, %s34, %s23
      %p36 = scmp.ge.s32.totalorder %s35, 1
      %s37 = scalar_select %p36, 0, %s35
      %s38 = sadd.s32 1, %s22
      %s39 = scalar_select %p36, %s38, %s22
      %p40 = scmp.ge.s32.totalorder %s39, 2
      %s41 = scalar_select %p40, 0, %s39
      %s42 = ssub.s32 %s22, %s41
      %s43 = ssub.s32 %s23, %s37
      %s44 = sor.u32 %s42, %s43
      %p45 = scmp.eq.s32.totalorder %s44, 0
      %s47 = sadd.s32 %s46, 1
      %s48 = scalar_select %p45, %s46, %s47
      %p51 = pneg %p45
      %p52 = scmp.eq.s32.totalorder %s15, 1
      %p53 = por %p51, %p52
      %p54 = scmp.ne.s32.totalorder %s46, %s49
      %p55 = scmp.eq.s32.totalorder %s15, 0
      %p56 = por %p54, %p55
      %p57 = scmp.ne.s32.totalorder %s46, %s49
      %p58 = scmp.eq.s32.totalorder %s20, 1
      %p59 = por %p57, %p58
      %p60 = scmp.ne.s32.totalorder %s49, %s50
      %p61 = scmp.eq.s32.totalorder %s20, 0
      %p62 = por %p60, %p61
      %p63 = scmp.ne.s32.totalorder %s49, %s50
      %p64 = scmp.eq.s32.totalorder %s21, 1
      %p65 = por %p63, %p64
      %p67 = scmp.ne.s32.totalorder %s50, %s66
      %p68 = scmp.eq.s32.totalorder %s21, 0
      %p69 = por %p67, %p68
      %s70 = ssub.s32 %s24, %s33
      %p71 = scmp.eq.s32.totalorder %s70, 0
      %s73 = sadd.s32 %s72, 1
      %s74 = scalar_select %p71, %s72, %s73
      %p77 = pneg %p71
      %p78 = scmp.eq.s32.totalorder %s15, 1
      %p79 = por %p77, %p78
      %p80 = scmp.ne.s32.totalorder %s72, %s75
      %p81 = scmp.eq.s32.totalorder %s15, 0
      %p82 = por %p80, %p81
      %p83 = scmp.ne.s32.totalorder %s72, %s75
      %p84 = scmp.eq.s32.totalorder %s20, 1
      %p85 = por %p83, %p84
      %p86 = scmp.ne.s32.totalorder %s75, %s76
      %p87 = scmp.eq.s32.totalorder %s20, 0
      %p88 = por %p86, %p87
      %p89 = scmp.ne.s32.totalorder %s75, %s76
      %p90 = scmp.eq.s32.totalorder %s21, 1
      %p91 = por %p89, %p90
      %p93 = scmp.ne.s32.totalorder %s76, %s92
      %p94 = scmp.eq.s32.totalorder %s21, 0
      %p95 = por %p93, %p94
      %s96 = ssub.s32 %s22, %s41
      %s97 = ssub.s32 %s23, %s37
      %s98 = sor.u32 %s96, %s97
      %s99 = ssub.s32 %s24, %s33
      %s100 = sor.u32 %s98, %s99
      %p101 = scmp.eq.s32.totalorder %s100, 0
      %s103 = sadd.s32 %s102, 1
      %s104 = scalar_select %p101, %s102, %s103
      %p107 = pneg %p101
      %p108 = scmp.eq.s32.totalorder %s15, 1
      %p109 = por %p107, %p108
      %p110 = scmp.ne.s32.totalorder %s102, %s105
      %p111 = scmp.eq.s32.totalorder %s15, 0
      %p112 = por %p110, %p111
      %p113 = scmp.ne.s32.totalorder %s102, %s105
      %p114 = scmp.eq.s32.totalorder %s20, 1
      %p115 = por %p113, %p114
      %p116 = scmp.ne.s32.totalorder %s105, %s106
      %p117 = scmp.eq.s32.totalorder %s20, 0
      %p118 = por %p116, %p117
      %p119 = scmp.ne.s32.totalorder %s105, %s106
      %p120 = scmp.eq.s32.totalorder %s21, 1
      %p121 = por %p119, %p120
      %p123 = scmp.ne.s32.totalorder %s106, %s122
      %p124 = scmp.eq.s32.totalorder %s21, 0
      %p125 = por %p123, %p124
      %p126 = scmp.le.s32.totalorder 1, %s15
      %p127 = scmp.lt.s32.totalorder %s15, 3
      %p128 = pnand %p126, %p127
      %p129 = pneg %p128
      // Predicated region
      $region9: #{tpu_custom_call.1} parent=5 // pred_check
        _
      $region10: #{tpu_custom_call.1} parent=5 // pred_check_branch
        %131 = sbr.rel (%p128) target = $region12
      $region11: #{tpu_custom_call.1} parent=5 // pred_region
        %s132 = ssub.s32 %s15, 1
        // Predicated region
        $region13: #{tpu_custom_call.1} parent=11 // pred_check
          %p133 = pneg %p88
        $region14: #{tpu_custom_call.1} parent=11 // pred_check_branch
          %135 = sbr.rel (%p133) target = $region16
        $region15: #{tpu_custom_call.1} parent=11 // pred_region
          %s136 = smul.u32 6, %s27
          %s138 = ssub.s32 6144, 6144
          %139 = vsyncadd [#allocation6], %s138
          %s140 = smul.addr %s136, 64
          %s141 = scalar_lea.hbm %s1, %s140
          %s142 = sshll.u32 [#allocation5], 4
          %s143 = int_to_ptr.vmem [resolvable:$true] %s142
          %148 = dma.hbm_to_vmem [thread:$0]  %s141, 6144, %s143, [#allocation6], 384, 384, 24
        $region16: #{tpu_custom_call.1} parent=11 // pred_fallthru
          _
      $region12: #{tpu_custom_call.1} parent=5 // pred_fallthru
        _
      %p149 = scmp.lt.s32.totalorder %s15, 2
      // Predicated region
      $region17: #{tpu_custom_call.1} parent=5 // pred_check
        %p150 = pneg %p149
      $region18: #{tpu_custom_call.1} parent=5 // pred_check_branch
        %152 = sbr.rel (%p150) target = $region20
      $region19: #{tpu_custom_call.1} parent=5 // pred_region
        // Predicated region
        $region21: #{tpu_custom_call.1} parent=19 // pred_check
          %p153 = pneg %p56
        $region22: #{tpu_custom_call.1} parent=19 // pred_check_branch
          %155 = sbr.rel (%p153) target = $region24
        $region23: #{tpu_custom_call.1} parent=19 // pred_region
          %s156 = sand.u32 %s46, 1
          %s157 = scalar_lea.sflag [#allocation3], %s156
          %s158 = sand.u32 %s46, 1
          %s159 = smul.addr %s158, 128
          %s160 = scalar_lea.vmem [#allocation2], %s159
          %s161 = smul.u32 32, %s23
          %s163 = ssub.s32 2048, 2048
          %164 = vsyncadd %s157, %s163
          %s165 = smul.addr %s22, 32
          %s166 = sadd.s32 %s161, %s165
          %s167 = smul.addr %s166, 64
          %s168 = scalar_lea.hbm %s0, %s167
          %s169 = sshll.u32 %s160, 4
          %s170 = int_to_ptr.vmem [resolvable:$true] %s169
          %175 = dma.hbm_to_vmem [thread:$0]  %s168, 2048, %s170, %s157, 64, 64, 4
        $region24: #{tpu_custom_call.1} parent=19 // pred_fallthru
          _
      $region20: #{tpu_custom_call.1} parent=5 // pred_fallthru
        _
      %p176 = scmp.le.s32.totalorder 1, %s15
      %p177 = scmp.lt.s32.totalorder %s15, 3
      %p178 = pnand %p176, %p177
      %p179 = pneg %p178
      // Predicated region
      $region25: #{tpu_custom_call.1} parent=5 // pred_check
        _
      $region26: #{tpu_custom_call.1} parent=5 // pred_check_branch
        %181 = sbr.rel (%p178) target = $region28
      $region27: #{tpu_custom_call.1} parent=5 // pred_region
        %s182 = ssub.s32 %s15, 1
        %s183 = sand.u32 %s49, 1
        %s184 = scalar_lea.sflag [#allocation3], %s183
        %s185 = sand.u32 %s49, 1
        %s186 = smul.addr %s185, 128
        %s187 = scalar_lea.vmem [#allocation2], %s186
        // Predicated region
        $region29: #{tpu_custom_call.1} parent=27 // pred_check
          %p188 = pneg %p62
        $region30: #{tpu_custom_call.1} parent=27 // pred_check_branch
          %190 = sbr.rel (%p188) target = $region32
        $region31: #{tpu_custom_call.1} parent=27 // pred_region
          %191 = dma.done %s184, 2048
        $region32: #{tpu_custom_call.1} parent=27 // pred_fallthru
          _
        // Predicated region
        $region33: #{tpu_custom_call.1} parent=27 // pred_check
          %p192 = pneg %p88
        $region34: #{tpu_custom_call.1} parent=27 // pred_check_branch
          %194 = sbr.rel (%p192) target = $region36
        $region35: #{tpu_custom_call.1} parent=27 // pred_region
          %195 = dma.done [#allocation6], 6144
        $region36: #{tpu_custom_call.1} parent=27 // pred_fallthru
          _
        %s196 = sand.u32 %s49, 1
        %s197 = scalar_lea.sflag [#allocation3], %s196
        %s198 = sand.u32 %s49, 1
        %s199 = smul.addr %s198, 128
        %s200 = scalar_lea.vmem [#allocation2], %s199
        %p201 = pneg %p62
        %p202 = pneg %p59
        %p203 = pneg %p88
        %p204 = pneg %p85
        %p205 = pneg %p118
        %p206 = pneg %p115
        %s207 = sand.u32 %s105, 1
        %s208 = scalar_lea.sflag [#allocation4], %s207
        %s209 = sand.u32 %s105, 1
        %s210 = smul.addr %s209, 768
        %s211 = scalar_lea.vmem [#allocation7], %s210
        %s212 = smul.u32 32, %s26
        %s213 = smul.u32 6, %s27
        %s214 = smul.u32 32, %s26
        %s215 = smul.u32 6, %s27
        %v217 = vld [vmem:[%s187] sm:$0xf]
        %v218 = vld [vmem:[%s187 + $0x4] sm:$0xf]
        %v219 = vld [vmem:[%s187 + $0x8] sm:$0xf]
        %v220 = vld [vmem:[%s187 + $0xc] sm:$0xf]
        %v221 = vld [vmem:[%s187 + $0x10] sm:$0xf]
        %v222 = vld [vmem:[%s187 + $0x14] sm:$0xf]
        %v223 = vld [vmem:[%s187 + $0x18] sm:$0xf]
        %v224 = vld [vmem:[%s187 + $0x1c] sm:$0xf]
        %v225 = vld [vmem:[%s187 + $0x20] sm:$0xf]
        %v226 = vld [vmem:[%s187 + $0x24] sm:$0xf]
        %v227 = vld [vmem:[%s187 + $0x28] sm:$0xf]
        %v228 = vld [vmem:[%s187 + $0x2c] sm:$0xf]
        %v229 = vld [vmem:[%s187 + $0x30] sm:$0xf]
        %v230 = vld [vmem:[%s187 + $0x34] sm:$0xf]
        %v231 = vld [vmem:[%s187 + $0x38] sm:$0xf]
        %v232 = vld [vmem:[%s187 + $0x3c] sm:$0xf]
        %v233 = vld [vmem:[%s187 + $0x40] sm:$0xf]
        %v234 = vld [vmem:[%s187 + $0x44] sm:$0xf]
        %v235 = vld [vmem:[%s187 + $0x48] sm:$0xf]
        %v236 = vld [vmem:[%s187 + $0x4c] sm:$0xf]
        %v237 = vld [vmem:[%s187 + $0x50] sm:$0xf]
        %v238 = vld [vmem:[%s187 + $0x54] sm:$0xf]
        %v239 = vld [vmem:[%s187 + $0x58] sm:$0xf]
        %v240 = vld [vmem:[%s187 + $0x5c] sm:$0xf]
        %v241 = vld [vmem:[%s187 + $0x60] sm:$0xf]
        %v242 = vld [vmem:[%s187 + $0x64] sm:$0xf]
        %v243 = vld [vmem:[%s187 + $0x68] sm:$0xf]
        %v244 = vld [vmem:[%s187 + $0x6c] sm:$0xf]
        %v245 = vld [vmem:[%s187 + $0x70] sm:$0xf]
        %v246 = vld [vmem:[%s187 + $0x74] sm:$0xf]
        %v247 = vld [vmem:[%s187 + $0x78] sm:$0xf]
        %v248 = vld [vmem:[%s187 + $0x7c] sm:$0xf]
        %v249 = vld [vmem:[#allocation5] sm:$0xff]
        %v250 = vld [vmem:[#allocation5 + $0x8] sm:$0xff]
        %v251 = vld [vmem:[#allocation5 + $0x10] sm:$0xff]
        %v252 = vld [vmem:[#allocation5 + $0x18] sm:$0xff]
        %v253 = vld [vmem:[#allocation5 + $0x20] sm:$0xff]
        %v254 = vld [vmem:[#allocation5 + $0x28] sm:$0xff]
        %v255 = vld [vmem:[#allocation5 + $0x30] sm:$0xff]
        %v256 = vld [vmem:[#allocation5 + $0x38] sm:$0xff]
        %v257 = vld [vmem:[#allocation5 + $0x40] sm:$0xff]
        %v258 = vld [vmem:[#allocation5 + $0x48] sm:$0xff]
        %v259 = vld [vmem:[#allocation5 + $0x50] sm:$0xff]
        %v260 = vld [vmem:[#allocation5 + $0x58] sm:$0xff]
        %v261 = vld [vmem:[#allocation5 + $0x60] sm:$0xff]
        %v262 = vld [vmem:[#allocation5 + $0x68] sm:$0xff]
        %v263 = vld [vmem:[#allocation5 + $0x70] sm:$0xff]
        %v264 = vld [vmem:[#allocation5 + $0x78] sm:$0xff]
        %v265 = vld [vmem:[#allocation5 + $0x80] sm:$0xff]
        %v266 = vld [vmem:[#allocation5 + $0x88] sm:$0xff]
        %v267 = vld [vmem:[#allocation5 + $0x90] sm:$0xff]
        %v268 = vld [vmem:[#allocation5 + $0x98] sm:$0xff]
        %v269 = vld [vmem:[#allocation5 + $0xa0] sm:$0xff]
        %v270 = vld [vmem:[#allocation5 + $0xa8] sm:$0xff]
        %v271 = vld [vmem:[#allocation5 + $0xb0] sm:$0xff]
        %v272 = vld [vmem:[#allocation5 + $0xb8] sm:$0xff]
        %v273 = vld [vmem:[#allocation5 + $0xc0] sm:$0xff]
        %v274 = vld [vmem:[#allocation5 + $0xc8] sm:$0xff]
        %v275 = vld [vmem:[#allocation5 + $0xd0] sm:$0xff]
        %v276 = vld [vmem:[#allocation5 + $0xd8] sm:$0xff]
        %v277 = vld [vmem:[#allocation5 + $0xe0] sm:$0xff]
        %v278 = vld [vmem:[#allocation5 + $0xe8] sm:$0xff]
        %v279 = vld [vmem:[#allocation5 + $0xf0] sm:$0xff]
        %v280 = vld [vmem:[#allocation5 + $0xf8] sm:$0xff]
        %v281 = vld [vmem:[#allocation5 + $0x100] sm:$0xff]
        %v282 = vld [vmem:[#allocation5 + $0x108] sm:$0xff]
        %v283 = vld [vmem:[#allocation5 + $0x110] sm:$0xff]
        %v284 = vld [vmem:[#allocation5 + $0x118] sm:$0xff]
        %v285 = vld [vmem:[#allocation5 + $0x120] sm:$0xff]
        %v286 = vld [vmem:[#allocation5 + $0x128] sm:$0xff]
        %v287 = vld [vmem:[#allocation5 + $0x130] sm:$0xff]
        %v288 = vld [vmem:[#allocation5 + $0x138] sm:$0xff]
        %v289 = vld [vmem:[#allocation5 + $0x140] sm:$0xff]
        %v290 = vld [vmem:[#allocation5 + $0x148] sm:$0xff]
        %v291 = vld [vmem:[#allocation5 + $0x150] sm:$0xff]
        %v292 = vld [vmem:[#allocation5 + $0x158] sm:$0xff]
        %v293 = vld [vmem:[#allocation5 + $0x160] sm:$0xff]
        %v294 = vld [vmem:[#allocation5 + $0x168] sm:$0xff]
        %v295 = vld [vmem:[#allocation5 + $0x170] sm:$0xff]
        %v296 = vld [vmem:[#allocation5 + $0x178] sm:$0xff]
        %v329 = vunpack.c.l.b16 %v217
        %v330 = vunpack.c.l.b16 %v218
        %v331 = vunpack.c.l.b16 %v219
        %v332 = vunpack.c.l.b16 %v220
        %v333 = vunpack.c.l.b16 %v221
        %v334 = vunpack.c.l.b16 %v222
        %v335 = vunpack.c.l.b16 %v223
        %v336 = vunpack.c.l.b16 %v224
        %v337 = vunpack.c.l.b16 %v225
        %v338 = vunpack.c.l.b16 %v226
        %v339 = vunpack.c.l.b16 %v227
        %v340 = vunpack.c.l.b16 %v228
        %v341 = vunpack.c.l.b16 %v229
        %v342 = vunpack.c.l.b16 %v230
        %v343 = vunpack.c.l.b16 %v231
        %v344 = vunpack.c.l.b16 %v232
        %v345 = vunpack.c.l.b16 %v233
        %v346 = vunpack.c.l.b16 %v234
        %v347 = vunpack.c.l.b16 %v235
        %v348 = vunpack.c.l.b16 %v236
        %v349 = vunpack.c.l.b16 %v237
        %v350 = vunpack.c.l.b16 %v238
        %v351 = vunpack.c.l.b16 %v239
        %v352 = vunpack.c.l.b16 %v240
        %v353 = vunpack.c.l.b16 %v241
        %v354 = vunpack.c.l.b16 %v242
        %v355 = vunpack.c.l.b16 %v243
        %v356 = vunpack.c.l.b16 %v244
        %v357 = vunpack.c.l.b16 %v245
        %v358 = vunpack.c.l.b16 %v246
        %v359 = vunpack.c.l.b16 %v247
        %v360 = vunpack.c.l.b16 %v248
        %v361 = vpack.c.b16 %v330, %v329
        %v362 = vpack.c.b16 %v332, %v331
        %v363 = vpack.c.b16 %v334, %v333
        %v364 = vpack.c.b16 %v336, %v335
        %v365 = vpack.c.b16 %v338, %v337
        %v366 = vpack.c.b16 %v340, %v339
        %v367 = vpack.c.b16 %v342, %v341
        %v368 = vpack.c.b16 %v344, %v343
        %v369 = vpack.c.b16 %v346, %v345
        %v370 = vpack.c.b16 %v348, %v347
        %v371 = vpack.c.b16 %v350, %v349
        %v372 = vpack.c.b16 %v352, %v351
        %v373 = vpack.c.b16 %v354, %v353
        %v374 = vpack.c.b16 %v356, %v355
        %v375 = vpack.c.b16 %v358, %v357
        %v376 = vpack.c.b16 %v360, %v359
        %v441 = vunpack.c.l.b16 %v249
        %v442 = vunpack.c.h.b16 %v249
        %v443 = vunpack.c.l.b16 %v250
        %v444 = vunpack.c.h.b16 %v250
        %v445 = vunpack.c.l.b16 %v251
        %v446 = vunpack.c.h.b16 %v251
        %v447 = vunpack.c.l.b16 %v252
        %v448 = vunpack.c.h.b16 %v252
        %v449 = vunpack.c.l.b16 %v253
        %v450 = vunpack.c.h.b16 %v253
        %v451 = vunpack.c.l.b16 %v254
        %v452 = vunpack.c.h.b16 %v254
        %v453 = vunpack.c.l.b16 %v255
        %v454 = vunpack.c.h.b16 %v255
        %v455 = vunpack.c.l.b16 %v256
        %v456 = vunpack.c.h.b16 %v256
        %v457 = vunpack.c.l.b16 %v257
        %v458 = vunpack.c.h.b16 %v257
        %v459 = vunpack.c.l.b16 %v258
        %v460 = vunpack.c.h.b16 %v258
        %v461 = vunpack.c.l.b16 %v259
        %v462 = vunpack.c.h.b16 %v259
        %v463 = vunpack.c.l.b16 %v260
        %v464 = vunpack.c.h.b16 %v260
        %v465 = vunpack.c.l.b16 %v261
        %v466 = vunpack.c.h.b16 %v261
        %v467 = vunpack.c.l.b16 %v262
        %v468 = vunpack.c.h.b16 %v262
        %v469 = vunpack.c.l.b16 %v263
        %v470 = vunpack.c.h.b16 %v263
        %v471 = vunpack.c.l.b16 %v264
        %v472 = vunpack.c.h.b16 %v264
        %v473 = vunpack.c.l.b16 %v265
        %v474 = vunpack.c.h.b16 %v265
        %v475 = vunpack.c.l.b16 %v266
        %v476 = vunpack.c.h.b16 %v266
        %v477 = vunpack.c.l.b16 %v267
        %v478 = vunpack.c.h.b16 %v267
        %v479 = vunpack.c.l.b16 %v268
        %v480 = vunpack.c.h.b16 %v268
        %v481 = vunpack.c.l.b16 %v269
        %v482 = vunpack.c.h.b16 %v269
        %v483 = vunpack.c.l.b16 %v270
        %v484 = vunpack.c.h.b16 %v270
        %v485 = vunpack.c.l.b16 %v271
        %v486 = vunpack.c.h.b16 %v271
        %v487 = vunpack.c.l.b16 %v272
        %v488 = vunpack.c.h.b16 %v272
        %v489 = vunpack.c.l.b16 %v273
        %v490 = vunpack.c.h.b16 %v273
        %v491 = vunpack.c.l.b16 %v274
        %v492 = vunpack.c.h.b16 %v274
        %v493 = vunpack.c.l.b16 %v275
        %v494 = vunpack.c.h.b16 %v275
        %v495 = vunpack.c.l.b16 %v276
        %v496 = vunpack.c.h.b16 %v276
        %v497 = vunpack.c.l.b16 %v277
        %v498 = vunpack.c.h.b16 %v277
        %v499 = vunpack.c.l.b16 %v278
        %v500 = vunpack.c.h.b16 %v278
        %v501 = vunpack.c.l.b16 %v279
        %v502 = vunpack.c.h.b16 %v279
        %v503 = vunpack.c.l.b16 %v280
        %v504 = vunpack.c.h.b16 %v280
        %v505 = vunpack.c.l.b16 %v281
        %v506 = vunpack.c.h.b16 %v281
        %v507 = vunpack.c.l.b16 %v282
        %v508 = vunpack.c.h.b16 %v282
        %v509 = vunpack.c.l.b16 %v283
        %v510 = vunpack.c.h.b16 %v283
        %v511 = vunpack.c.l.b16 %v284
        %v512 = vunpack.c.h.b16 %v284
        %v513 = vunpack.c.l.b16 %v285
        %v514 = vunpack.c.h.b16 %v285
        %v515 = vunpack.c.l.b16 %v286
        %v516 = vunpack.c.h.b16 %v286
        %v517 = vunpack.c.l.b16 %v287
        %v518 = vunpack.c.h.b16 %v287
        %v519 = vunpack.c.l.b16 %v288
        %v520 = vunpack.c.h.b16 %v288
        %v521 = vunpack.c.l.b16 %v289
        %v522 = vunpack.c.h.b16 %v289
        %v523 = vunpack.c.l.b16 %v290
        %v524 = vunpack.c.h.b16 %v290
        %v525 = vunpack.c.l.b16 %v291
        %v526 = vunpack.c.h.b16 %v291
        %v527 = vunpack.c.l.b16 %v292
        %v528 = vunpack.c.h.b16 %v292
        %v529 = vunpack.c.l.b16 %v293
        %v530 = vunpack.c.h.b16 %v293
        %v531 = vunpack.c.l.b16 %v294
        %v532 = vunpack.c.h.b16 %v294
        %v533 = vunpack.c.l.b16 %v295
        %v534 = vunpack.c.h.b16 %v295
        %v535 = vunpack.c.l.b16 %v296
        %v536 = vunpack.c.h.b16 %v296
        %v537 = vpack.c.b16 %v447, %v441
        %v538 = vpack.c.b16 %v448, %v442
        %v539 = vpack.c.b16 %v449, %v443
        %v540 = vpack.c.b16 %v450, %v444
        %v541 = vpack.c.b16 %v451, %v445
        %v542 = vpack.c.b16 %v452, %v446
        %v543 = vpack.c.b16 %v459, %v453
        %v544 = vpack.c.b16 %v460, %v454
        %v545 = vpack.c.b16 %v461, %v455
        %v546 = vpack.c.b16 %v462, %v456
        %v547 = vpack.c.b16 %v463, %v457
        %v548 = vpack.c.b16 %v464, %v458
        %v549 = vpack.c.b16 %v471, %v465
        %v550 = vpack.c.b16 %v472, %v466
        %v551 = vpack.c.b16 %v473, %v467
        %v552 = vpack.c.b16 %v474, %v468
        %v553 = vpack.c.b16 %v475, %v469
        %v554 = vpack.c.b16 %v476, %v470
        %v555 = vpack.c.b16 %v483, %v477
        %v556 = vpack.c.b16 %v484, %v478
        %v557 = vpack.c.b16 %v485, %v479
        %v558 = vpack.c.b16 %v486, %v480
        %v559 = vpack.c.b16 %v487, %v481
        %v560 = vpack.c.b16 %v488, %v482
        %v561 = vpack.c.b16 %v495, %v489
        %v562 = vpack.c.b16 %v496, %v490
        %v563 = vpack.c.b16 %v497, %v491
        %v564 = vpack.c.b16 %v498, %v492
        %v565 = vpack.c.b16 %v499, %v493
        %v566 = vpack.c.b16 %v500, %v494
        %v567 = vpack.c.b16 %v507, %v501
        %v568 = vpack.c.b16 %v508, %v502
        %v569 = vpack.c.b16 %v509, %v503
        %v570 = vpack.c.b16 %v510, %v504
        %v571 = vpack.c.b16 %v511, %v505
        %v572 = vpack.c.b16 %v512, %v506
        %v573 = vpack.c.b16 %v519, %v513
        %v574 = vpack.c.b16 %v520, %v514
        %v575 = vpack.c.b16 %v521, %v515
        %v576 = vpack.c.b16 %v522, %v516
        %v577 = vpack.c.b16 %v523, %v517
        %v578 = vpack.c.b16 %v524, %v518
        %v579 = vpack.c.b16 %v531, %v525
        %v580 = vpack.c.b16 %v532, %v526
        %v581 = vpack.c.b16 %v533, %v527
        %v582 = vpack.c.b16 %v534, %v528
        %v583 = vpack.c.b16 %v535, %v529
        %v584 = vpack.c.b16 %v536, %v530
        %633 = vmatprep.subr.bf16.mxu0 %v538
        %634 = vmatpush1.bf16.msra.mxu0 %v537
        %635 = vmatprep.subr.bf16.mxu0 %v544
        %636 = vmatpush1.bf16.msra.mxu0 %v543
        %637 = vmatprep.subr.bf16.mxu0 %v550
        %638 = vmatpush1.bf16.msra.mxu0 %v549
        %639 = vmatprep.subr.bf16.mxu0 %v556
        %640 = vmatpush1.bf16.msra.mxu0 %v555
        %641 = vmatprep.subr.bf16.mxu0 %v562
        %642 = vmatpush1.bf16.msra.mxu0 %v561
        %643 = vmatprep.subr.bf16.mxu0 %v568
        %644 = vmatpush1.bf16.msra.mxu0 %v567
        %645 = vmatprep.subr.bf16.mxu0 %v574
        %646 = vmatpush1.bf16.msra.mxu0 %v573
        %647 = vmatprep.subr.bf16.mxu0 %v580
        %648 = vmatpush1.bf16.msra.mxu0 %v579
        %649 = vmatprep.subr.bf16.mxu0 0
        %650 = vmatpush1.bf16.msra.mxu0 0
        %651 = vmatprep.subr.bf16.mxu0 0
        %652 = vmatpush1.bf16.msra.mxu0 0
        %653 = vmatprep.subr.bf16.mxu0 0
        %654 = vmatpush1.bf16.msra.mxu0 0
        %655 = vmatprep.subr.bf16.mxu0 0
        %656 = vmatpush1.bf16.msra.mxu0 0
        %657 = vmatprep.subr.bf16.mxu0 0
        %658 = vmatpush1.bf16.msra.mxu0 0
        %659 = vmatprep.subr.bf16.mxu0 0
        %660 = vmatpush1.bf16.msra.mxu0 0
        %661 = vmatprep.subr.bf16.mxu0 0
        %662 = vmatpush1.bf16.msra.mxu0 0
        %663 = vmatprep.subr.bf16.mxu0 0
        %664 = vmatpush1.bf16.msra.mxu0 0
        %665 = vmatprep.mubr.bf16.mxu0 0
        %666 = vmatmul.mubr.bf16.gmra.mrb[0].mxu0 %v361
        %v667 = vpop.f32.mrb[0].mxu0
        %v668 = vadd.f32 0.0, %v667
        %v669 = vpop.f32.mrb[0].mxu0
        %v670 = vadd.f32 0.0, %v669
        %v671 = vpop.f32.mrb[0].mxu0
        %v672 = vadd.f32 0.0, %v671
        %v673 = vpop.f32.mrb[0].mxu0
        %v674 = vadd.f32 0.0, %v673
        %675 = vmatprep.mubr.bf16.mxu0 0
        %676 = vmatmul.mubr.bf16.gmra.mrb[0].mxu0 %v362
        %v677 = vpop.f32.mrb[0].mxu0
        %v678 = vadd.f32 0.0, %v677
        %v679 = vpop.f32.mrb[0].mxu0
        %v680 = vadd.f32 0.0, %v679
        %v681 = vpop.f32.mrb[0].mxu0
        %v682 = vadd.f32 0.0, %v681
        %v683 = vpop.f32.mrb[0].mxu0
        %v684 = vadd.f32 0.0, %v683
        %685 = vmatprep.mubr.bf16.mxu0 0
        %686 = vmatmul.mubr.bf16.gmra.mrb[0].mxu0 %v363
        %v687 = vpop.f32.mrb[0].mxu0
        %v688 = vadd.f32 0.0, %v687
        %v689 = vpop.f32.mrb[0].mxu0
        %v690 = vadd.f32 0.0, %v689
        %v691 = vpop.f32.mrb[0].mxu0
        %v692 = vadd.f32 0.0, %v691
        %v693 = vpop.f32.mrb[0].mxu0
        %v694 = vadd.f32 0.0, %v693
        %695 = vmatprep.mubr.bf16.mxu0 0
        %696 = vmatmul.mubr.bf16.gmra.mrb[0].mxu0 %v364
        %v697 = vpop.f32.mrb[0].mxu0
        %v698 = vadd.f32 0.0, %v697
        %v699 = vpop.f32.mrb[0].mxu0
        %v700 = vadd.f32 0.0, %v699
        %v701 = vpop.f32.mrb[0].mxu0
        %v702 = vadd.f32 0.0, %v701
        %v703 = vpop.f32.mrb[0].mxu0
        %v704 = vadd.f32 0.0, %v703
        %705 = vmatprep.mubr.bf16.mxu0 0
        %706 = vmatmul.mubr.bf16.gmra.mrb[0].mxu0 %v365
        %v707 = vpop.f32.mrb[0].mxu0
        %v708 = vadd.f32 0.0, %v707
        %v709 = vpop.f32.mrb[0].mxu0
        %v710 = vadd.f32 0.0, %v709
        %v711 = vpop.f32.mrb[0].mxu0
        %v712 = vadd.f32 0.0, %v711
        %v713 = vpop.f32.mrb[0].mxu0
        %v714 = vadd.f32 0.0, %v713
        %715 = vmatprep.mubr.bf16.mxu0 0
        %716 = vmatmul.mubr.bf16.gmra.mrb[0].mxu0 %v366
        %v717 = vpop.f32.mrb[0].mxu0
        %v718 = vadd.f32 0.0, %v717
        %v719 = vpop.f32.mrb[0].mxu0
        %v720 = vadd.f32 0.0, %v719
        %v721 = vpop.f32.mrb[0].mxu0
        %v722 = vadd.f32 0.0, %v721
        %v723 = vpop.f32.mrb[0].mxu0
        %v724 = vadd.f32 0.0, %v723
        %725 = vmatprep.mubr.bf16.mxu0 0
        %726 = vmatmul.mubr.bf16.gmra.mrb[0].mxu0 %v367
        %v727 = vpop.f32.mrb[0].mxu0
        %v728 = vadd.f32 0.0, %v727
        %v729 = vpop.f32.mrb[0].mxu0
        %v730 = vadd.f32 0.0, %v729
        %v731 = vpop.f32.mrb[0].mxu0
        %v732 = vadd.f32 0.0, %v731
        %v733 = vpop.f32.mrb[0].mxu0
        %v734 = vadd.f32 0.0, %v733
        %735 = vmatprep.mubr.bf16.mxu0 0
        %736 = vmatmul.mubr.bf16.gmra.mrb[0].mxu0 %v368
        %v737 = vpop.f32.mrb[0].mxu0
        %v738 = vadd.f32 0.0, %v737
        %v739 = vpop.f32.mrb[0].mxu0
        %v740 = vadd.f32 0.0, %v739
        %v741 = vpop.f32.mrb[0].mxu0
        %v742 = vadd.f32 0.0, %v741
        %v743 = vpop.f32.mrb[0].mxu0
        %v744 = vadd.f32 0.0, %v743
        %745 = vmatprep.mubr.bf16.mxu0 0
        %746 = vmatmul.mubr.bf16.gmra.mrb[0].mxu0 %v369
        %v747 = vpop.f32.mrb[0].mxu0
        %v748 = vadd.f32 0.0, %v747
        %v749 = vpop.f32.mrb[0].mxu0
        %v750 = vadd.f32 0.0, %v749
        %v751 = vpop.f32.mrb[0].mxu0
        %v752 = vadd.f32 0.0, %v751
        %v753 = vpop.f32.mrb[0].mxu0
        %v754 = vadd.f32 0.0, %v753
        %755 = vmatprep.mubr.bf16.mxu0 0
        %756 = vmatmul.mubr.bf16.gmra.mrb[0].mxu0 %v370
        %v757 = vpop.f32.mrb[0].mxu0
        %v758 = vadd.f32 0.0, %v757
        %v759 = vpop.f32.mrb[0].mxu0
        %v760 = vadd.f32 0.0, %v759
        %v761 = vpop.f32.mrb[0].mxu0
        %v762 = vadd.f32 0.0, %v761
        %v763 = vpop.f32.mrb[0].mxu0
        %v764 = vadd.f32 0.0, %v763
        %765 = vmatprep.mubr.bf16.mxu0 0
        %766 = vmatmul.mubr.bf16.gmra.mrb[0].mxu0 %v371
        %v767 = vpop.f32.mrb[0].mxu0
        %v768 = vadd.f32 0.0, %v767
        %v769 = vpop.f32.mrb[0].mxu0
        %v770 = vadd.f32 0.0, %v769
        %v771 = vpop.f32.mrb[0].mxu0
        %v772 = vadd.f32 0.0, %v771
        %v773 = vpop.f32.mrb[0].mxu0
        %v774 = vadd.f32 0.0, %v773
        %775 = vmatprep.mubr.bf16.mxu0 0
        %776 = vmatmul.mubr.bf16.gmra.mrb[0].mxu0 %v372
        %v777 = vpop.f32.mrb[0].mxu0
        %v778 = vadd.f32 0.0, %v777
        %v779 = vpop.f32.mrb[0].mxu0
        %v780 = vadd.f32 0.0, %v779
        %v781 = vpop.f32.mrb[0].mxu0
        %v782 = vadd.f32 0.0, %v781
        %v783 = vpop.f32.mrb[0].mxu0
        %v784 = vadd.f32 0.0, %v783
        %785 = vmatprep.mubr.bf16.mxu0 0
        %786 = vmatmul.mubr.bf16.gmra.mrb[0].mxu0 %v373
        %v787 = vpop.f32.mrb[0].mxu0
        %v788 = vadd.f32 0.0, %v787
        %v789 = vpop.f32.mrb[0].mxu0
        %v790 = vadd.f32 0.0, %v789
        %v791 = vpop.f32.mrb[0].mxu0
        %v792 = vadd.f32 0.0, %v791
        %v793 = vpop.f32.mrb[0].mxu0
        %v794 = vadd.f32 0.0, %v793
        %795 = vmatprep.mubr.bf16.mxu0 0
        %796 = vmatmul.mubr.bf16.gmra.mrb[0].mxu0 %v374
        %v797 = vpop.f32.mrb[0].mxu0
        %v798 = vadd.f32 0.0, %v797
        %v799 = vpop.f32.mrb[0].mxu0
        %v800 = vadd.f32 0.0, %v799
        %v801 = vpop.f32.mrb[0].mxu0
        %v802 = vadd.f32 0.0, %v801
        %v803 = vpop.f32.mrb[0].mxu0
        %v804 = vadd.f32 0.0, %v803
        %805 = vmatprep.mubr.bf16.mxu0 0
        %806 = vmatmul.mubr.bf16.gmra.mrb[0].mxu0 %v375
        %v807 = vpop.f32.mrb[0].mxu0
        %v808 = vadd.f32 0.0, %v807
        %v809 = vpop.f32.mrb[0].mxu0
        %v810 = vadd.f32 0.0, %v809
        %v811 = vpop.f32.mrb[0].mxu0
        %v812 = vadd.f32 0.0, %v811
        %v813 = vpop.f32.mrb[0].mxu0
        %v814 = vadd.f32 0.0, %v813
        %815 = vmatprep.mubr.bf16.mxu0 0
        %816 = vmatmul.mubr.bf16.gmra.mrb[0].mxu0 %v376
        %v817 = vpop.f32.mrb[0].mxu0
        %v818 = vadd.f32 0.0, %v817
        %v819 = vpop.f32.mrb[0].mxu0
        %v820 = vadd.f32 0.0, %v819
        %v821 = vpop.f32.mrb[0].mxu0
        %v822 = vadd.f32 0.0, %v821
        %v823 = vpop.f32.mrb[0].mxu0
        %v824 = vadd.f32 0.0, %v823
        %825 = vdwg.mxu0
        %826 = vmatprep.subr.bf16.mxu0 %v540
        %827 = vmatpush1.bf16.msra.mxu0 %v539
        %828 = vmatprep.subr.bf16.mxu0 %v546
        %829 = vmatpush1.bf16.msra.mxu0 %v545
        %830 = vmatprep.subr.bf16.mxu0 %v552
        %831 = vmatpush1.bf16.msra.mxu0 %v551
        %832 = vmatprep.subr.bf16.mxu0 %v558
        %833 = vmatpush1.bf16.msra.mxu0 %v557
        %834 = vmatprep.subr.bf16.mxu0 %v564
        %835 = vmatpush1.bf16.msra.mxu0 %v563
        %836 = vmatprep.subr.bf16.mxu0 %v570
        %837 = vmatpush1.bf16.msra.mxu0 %v569
        %838 = vmatprep.subr.bf16.mxu0 %v576
        %839 = vmatpush1.bf16.msra.mxu0 %v575
        %840 = vmatprep.subr.bf16.mxu0 %v582
        %841 = vmatpush1.bf16.msra.mxu0 %v581
        %842 = vmatprep.subr.bf16.mxu0 0
        %843 = vmatpush1.bf16.msra.mxu0 0
        %844 = vmatprep.subr.bf16.mxu0 0
        %845 = vmatpush1.bf16.msra.mxu0 0
        %846 = vmatprep.subr.bf16.mxu0 0
        %847 = vmatpush1.bf16.msra.mxu0 0
        %848 = vmatprep.subr.bf16.mxu0 0
        %849 = vmatpush1.bf16.msra.mxu0 0
        %850 = vmatprep.subr.bf16.mxu0 0
        %851 = vmatpush1.bf16.msra.mxu0 0
        %852 = vmatprep.subr.bf16.mxu0 0
        %853 = vmatpush1.bf16.msra.mxu0 0
        %854 = vmatprep.subr.bf16.mxu0 0
        %855 = vmatpush1.bf16.msra.mxu0 0
        %856 = vmatprep.subr.bf16.mxu0 0
        %857 = vmatpush1.bf16.msra.mxu0 0
        %858 = vmatprep.mubr.bf16.mxu0 0
        %859 = vmatmul.mubr.bf16.gmra.mrb[0].mxu0 %v361
        %v860 = vpop.f32.mrb[0].mxu0
        %v861 = vadd.f32 0.0, %v860
        %v862 = vpop.f32.mrb[0].mxu0
        %v863 = vadd.f32 0.0, %v862
        %v864 = vpop.f32.mrb[0].mxu0
        %v865 = vadd.f32 0.0, %v864
        %v866 = vpop.f32.mrb[0].mxu0
        %v867 = vadd.f32 0.0, %v866
        %868 = vmatprep.mubr.bf16.mxu0 0
        %869 = vmatmul.mubr.bf16.gmra.mrb[0].mxu0 %v362
        %v870 = vpop.f32.mrb[0].mxu0
        %v871 = vadd.f32 0.0, %v870
        %v872 = vpop.f32.mrb[0].mxu0
        %v873 = vadd.f32 0.0, %v872
        %v874 = vpop.f32.mrb[0].mxu0
        %v875 = vadd.f32 0.0, %v874
        %v876 = vpop.f32.mrb[0].mxu0
        %v877 = vadd.f32 0.0, %v876
        %878 = vmatprep.mubr.bf16.mxu0 0
        %879 = vmatmul.mubr.bf16.gmra.mrb[0].mxu0 %v363
        %v880 = vpop.f32.mrb[0].mxu0
        %v881 = vadd.f32 0.0, %v880
        %v882 = vpop.f32.mrb[0].mxu0
        %v883 = vadd.f32 0.0, %v882
        %v884 = vpop.f32.mrb[0].mxu0
        %v885 = vadd.f32 0.0, %v884
        %v886 = vpop.f32.mrb[0].mxu0
        %v887 = vadd.f32 0.0, %v886
        %888 = vmatprep.mubr.bf16.mxu0 0
        %889 = vmatmul.mubr.bf16.gmra.mrb[0].mxu0 %v364
        %v890 = vpop.f32.mrb[0].mxu0
        %v891 = vadd.f32 0.0, %v890
        %v892 = vpop.f32.mrb[0].mxu0
        %v893 = vadd.f32 0.0, %v892
        %v894 = vpop.f32.mrb[0].mxu0
        %v895 = vadd.f32 0.0, %v894
        %v896 = vpop.f32.mrb[0].mxu0
        %v897 = vadd.f32 0.0, %v896
        %898 = vmatprep.mubr.bf16.mxu0 0
        %899 = vmatmul.mubr.bf16.gmra.mrb[0].mxu0 %v365
        %v900 = vpop.f32.mrb[0].mxu0
        %v901 = vadd.f32 0.0, %v900
        %v902 = vpop.f32.mrb[0].mxu0
        %v903 = vadd.f32 0.0, %v902
        %v904 = vpop.f32.mrb[0].mxu0
        %v905 = vadd.f32 0.0, %v904
        %v906 = vpop.f32.mrb[0].mxu0
        %v907 = vadd.f32 0.0, %v906
        %908 = vmatprep.mubr.bf16.mxu0 0
        %909 = vmatmul.mubr.bf16.gmra.mrb[0].mxu0 %v366
        %v910 = vpop.f32.mrb[0].mxu0
        %v911 = vadd.f32 0.0, %v910
        %v912 = vpop.f32.mrb[0].mxu0
        %v913 = vadd.f32 0.0, %v912
        %v914 = vpop.f32.mrb[0].mxu0
        %v915 = vadd.f32 0.0, %v914
        %v916 = vpop.f32.mrb[0].mxu0
        %v917 = vadd.f32 0.0, %v916
        %918 = vmatprep.mubr.bf16.mxu0 0
        %919 = vmatmul.mubr.bf16.gmra.mrb[0].mxu0 %v367
        %v920 = vpop.f32.mrb[0].mxu0
        %v921 = vadd.f32 0.0, %v920
        %v922 = vpop.f32.mrb[0].mxu0
        %v923 = vadd.f32 0.0, %v922
        %v924 = vpop.f32.mrb[0].mxu0
        %v925 = vadd.f32 0.0, %v924
        %v926 = vpop.f32.mrb[0].mxu0
        %v927 = vadd.f32 0.0, %v926
        %928 = vmatprep.mubr.bf16.mxu0 0
        %929 = vmatmul.mubr.bf16.gmra.mrb[0].mxu0 %v368
        %v930 = vpop.f32.mrb[0].mxu0
        %v931 = vadd.f32 0.0, %v930
        %v932 = vpop.f32.mrb[0].mxu0
        %v933 = vadd.f32 0.0, %v932
        %v934 = vpop.f32.mrb[0].mxu0
        %v935 = vadd.f32 0.0, %v934
        %v936 = vpop.f32.mrb[0].mxu0
        %v937 = vadd.f32 0.0, %v936
        %938 = vmatprep.mubr.bf16.mxu0 0
        %939 = vmatmul.mubr.bf16.gmra.mrb[0].mxu0 %v369
        %v940 = vpop.f32.mrb[0].mxu0
        %v941 = vadd.f32 0.0, %v940
        %v942 = vpop.f32.mrb[0].mxu0
        %v943 = vadd.f32 0.0, %v942
        %v944 = vpop.f32.mrb[0].mxu0
        %v945 = vadd.f32 0.0, %v944
        %v946 = vpop.f32.mrb[0].mxu0
        %v947 = vadd.f32 0.0, %v946
        %948 = vmatprep.mubr.bf16.mxu0 0
        %949 = vmatmul.mubr.bf16.gmra.mrb[0].mxu0 %v370
        %v950 = vpop.f32.mrb[0].mxu0
        %v951 = vadd.f32 0.0, %v950
        %v952 = vpop.f32.mrb[0].mxu0
        %v953 = vadd.f32 0.0, %v952
        %v954 = vpop.f32.mrb[0].mxu0
        %v955 = vadd.f32 0.0, %v954
        %v956 = vpop.f32.mrb[0].mxu0
        %v957 = vadd.f32 0.0, %v956
        %958 = vmatprep.mubr.bf16.mxu0 0
        %959 = vmatmul.mubr.bf16.gmra.mrb[0].mxu0 %v371
        %v960 = vpop.f32.mrb[0].mxu0
        %v961 = vadd.f32 0.0, %v960
        %v962 = vpop.f32.mrb[0].mxu0
        %v963 = vadd.f32 0.0, %v962
        %v964 = vpop.f32.mrb[0].mxu0
        %v965 = vadd.f32 0.0, %v964
        %v966 = vpop.f32.mrb[0].mxu0
        %v967 = vadd.f32 0.0, %v966
        %968 = vmatprep.mubr.bf16.mxu0 0
        %969 = vmatmul.mubr.bf16.gmra.mrb[0].mxu0 %v372
        %v970 = vpop.f32.mrb[0].mxu0
        %v971 = vadd.f32 0.0, %v970
        %v972 = vpop.f32.mrb[0].mxu0
        %v973 = vadd.f32 0.0, %v972
        %v974 = vpop.f32.mrb[0].mxu0
        %v975 = vadd.f32 0.0, %v974
        %v976 = vpop.f32.mrb[0].mxu0
        %v977 = vadd.f32 0.0, %v976
        %978 = vmatprep.mubr.bf16.mxu0 0
        %979 = vmatmul.mubr.bf16.gmra.mrb[0].mxu0 %v373
        %v980 = vpop.f32.mrb[0].mxu0
        %v981 = vadd.f32 0.0, %v980
        %v982 = vpop.f32.mrb[0].mxu0
        %v983 = vadd.f32 0.0, %v982
        %v984 = vpop.f32.mrb[0].mxu0
        %v985 = vadd.f32 0.0, %v984
        %v986 = vpop.f32.mrb[0].mxu0
        %v987 = vadd.f32 0.0, %v986
        %988 = vmatprep.mubr.bf16.mxu0 0
        %989 = vmatmul.mubr.bf16.gmra.mrb[0].mxu0 %v374
        %v990 = vpop.f32.mrb[0].mxu0
        %v991 = vadd.f32 0.0, %v990
        %v992 = vpop.f32.mrb[0].mxu0
        %v993 = vadd.f32 0.0, %v992
        %v994 = vpop.f32.mrb[0].mxu0
        %v995 = vadd.f32 0.0, %v994
        %v996 = vpop.f32.mrb[0].mxu0
        %v997 = vadd.f32 0.0, %v996
        %998 = vmatprep.mubr.bf16.mxu0 0
        %999 = vmatmul.mubr.bf16.gmra.mrb[0].mxu0 %v375
        %v1000 = vpop.f32.mrb[0].mxu0
        %v1001 = vadd.f32 0.0, %v1000
        %v1002 = vpop.f32.mrb[0].mxu0
        %v1003 = vadd.f32 0.0, %v1002
        %v1004 = vpop.f32.mrb[0].mxu0
        %v1005 = vadd.f32 0.0, %v1004
        %v1006 = vpop.f32.mrb[0].mxu0
        %v1007 = vadd.f32 0.0, %v1006
        %1008 = vmatprep.mubr.bf16.mxu0 0
        %1009 = vmatmul.mubr.bf16.gmra.mrb[0].mxu0 %v376
        %v1010 = vpop.f32.mrb[0].mxu0
        %v1011 = vadd.f32 0.0, %v1010
        %v1012 = vpop.f32.mrb[0].mxu0
        %v1013 = vadd.f32 0.0, %v1012
        %v1014 = vpop.f32.mrb[0].mxu0
        %v1015 = vadd.f32 0.0, %v1014
        %v1016 = vpop.f32.mrb[0].mxu0
        %v1017 = vadd.f32 0.0, %v1016
        %1018 = vdwg.mxu0
        %1019 = vmatprep.subr.bf16.mxu0 %v542
        %1020 = vmatpush1.bf16.msra.mxu0 %v541
        %1021 = vmatprep.subr.bf16.mxu0 %v548
        %1022 = vmatpush1.bf16.msra.mxu0 %v547
        %1023 = vmatprep.subr.bf16.mxu0 %v554
        %1024 = vmatpush1.bf16.msra.mxu0 %v553
        %1025 = vmatprep.subr.bf16.mxu0 %v560
        %1026 = vmatpush1.bf16.msra.mxu0 %v559
        %1027 = vmatprep.subr.bf16.mxu0 %v566
        %1028 = vmatpush1.bf16.msra.mxu0 %v565
        %1029 = vmatprep.subr.bf16.mxu0 %v572
        %1030 = vmatpush1.bf16.msra.mxu0 %v571
        %1031 = vmatprep.subr.bf16.mxu0 %v578
        %1032 = vmatpush1.bf16.msra.mxu0 %v577
        %1033 = vmatprep.subr.bf16.mxu0 %v584
        %1034 = vmatpush1.bf16.msra.mxu0 %v583
        %1035 = vmatprep.subr.bf16.mxu0 0
        %1036 = vmatpush1.bf16.msra.mxu0 0
        %1037 = vmatprep.subr.bf16.mxu0 0
        %1038 = vmatpush1.bf16.msra.mxu0 0
        %1039 = vmatprep.subr.bf16.mxu0 0
        %1040 = vmatpush1.bf16.msra.mxu0 0
        %1041 = vmatprep.subr.bf16.mxu0 0
        %1042 = vmatpush1.bf16.msra.mxu0 0
        %1043 = vmatprep.subr.bf16.mxu0 0
        %1044 = vmatpush1.bf16.msra.mxu0 0
        %1045 = vmatprep.subr.bf16.mxu0 0
        %1046 = vmatpush1.bf16.msra.mxu0 0
        %1047 = vmatprep.subr.bf16.mxu0 0
        %1048 = vmatpush1.bf16.msra.mxu0 0
        %1049 = vmatprep.subr.bf16.mxu0 0
        %1050 = vmatpush1.bf16.msra.mxu0 0
        %1051 = vmatprep.mubr.bf16.mxu0 0
        %1052 = vmatmul.mubr.bf16.gmra.mrb[0].mxu0 %v361
        %v1053 = vpop.f32.mrb[0].mxu0
        %v1054 = vadd.f32 0.0, %v1053
        %v1055 = vpop.f32.mrb[0].mxu0
        %v1056 = vadd.f32 0.0, %v1055
        %v1057 = vpop.f32.mrb[0].mxu0
        %v1058 = vadd.f32 0.0, %v1057
        %v1059 = vpop.f32.mrb[0].mxu0
        %v1060 = vadd.f32 0.0, %v1059
        %1061 = vmatprep.mubr.bf16.mxu0 0
        %1062 = vmatmul.mubr.bf16.gmra.mrb[0].mxu0 %v362
        %v1063 = vpop.f32.mrb[0].mxu0
        %v1064 = vadd.f32 0.0, %v1063
        %v1065 = vpop.f32.mrb[0].mxu0
        %v1066 = vadd.f32 0.0, %v1065
        %v1067 = vpop.f32.mrb[0].mxu0
        %v1068 = vadd.f32 0.0, %v1067
        %v1069 = vpop.f32.mrb[0].mxu0
        %v1070 = vadd.f32 0.0, %v1069
        %1071 = vmatprep.mubr.bf16.mxu0 0
        %1072 = vmatmul.mubr.bf16.gmra.mrb[0].mxu0 %v363
        %v1073 = vpop.f32.mrb[0].mxu0
        %v1074 = vadd.f32 0.0, %v1073
        %v1075 = vpop.f32.mrb[0].mxu0
        %v1076 = vadd.f32 0.0, %v1075
        %v1077 = vpop.f32.mrb[0].mxu0
        %v1078 = vadd.f32 0.0, %v1077
        %v1079 = vpop.f32.mrb[0].mxu0
        %v1080 = vadd.f32 0.0, %v1079
        %1081 = vmatprep.mubr.bf16.mxu0 0
        %1082 = vmatmul.mubr.bf16.gmra.mrb[0].mxu0 %v364
        %v1083 = vpop.f32.mrb[0].mxu0
        %v1084 = vadd.f32 0.0, %v1083
        %v1085 = vpop.f32.mrb[0].mxu0
        %v1086 = vadd.f32 0.0, %v1085
        %v1087 = vpop.f32.mrb[0].mxu0
        %v1088 = vadd.f32 0.0, %v1087
        %v1089 = vpop.f32.mrb[0].mxu0
        %v1090 = vadd.f32 0.0, %v1089
        %1091 = vmatprep.mubr.bf16.mxu0 0
        %1092 = vmatmul.mubr.bf16.gmra.mrb[0].mxu0 %v365
        %v1093 = vpop.f32.mrb[0].mxu0
        %v1094 = vadd.f32 0.0, %v1093
        %v1095 = vpop.f32.mrb[0].mxu0
        %v1096 = vadd.f32 0.0, %v1095
        %v1097 = vpop.f32.mrb[0].mxu0
        %v1098 = vadd.f32 0.0, %v1097
        %v1099 = vpop.f32.mrb[0].mxu0
        %v1100 = vadd.f32 0.0, %v1099
        %1101 = vmatprep.mubr.bf16.mxu0 0
        %1102 = vmatmul.mubr.bf16.gmra.mrb[0].mxu0 %v366
        %v1103 = vpop.f32.mrb[0].mxu0
        %v1104 = vadd.f32 0.0, %v1103
        %v1105 = vpop.f32.mrb[0].mxu0
        %v1106 = vadd.f32 0.0, %v1105
        %v1107 = vpop.f32.mrb[0].mxu0
        %v1108 = vadd.f32 0.0, %v1107
        %v1109 = vpop.f32.mrb[0].mxu0
        %v1110 = vadd.f32 0.0, %v1109
        %1111 = vmatprep.mubr.bf16.mxu0 0
        %1112 = vmatmul.mubr.bf16.gmra.mrb[0].mxu0 %v367
        %v1113 = vpop.f32.mrb[0].mxu0
        %v1114 = vadd.f32 0.0, %v1113
        %v1115 = vpop.f32.mrb[0].mxu0
        %v1116 = vadd.f32 0.0, %v1115
        %v1117 = vpop.f32.mrb[0].mxu0
        %v1118 = vadd.f32 0.0, %v1117
        %v1119 = vpop.f32.mrb[0].mxu0
        %v1120 = vadd.f32 0.0, %v1119
        %1121 = vmatprep.mubr.bf16.mxu0 0
        %1122 = vmatmul.mubr.bf16.gmra.mrb[0].mxu0 %v368
        %v1123 = vpop.f32.mrb[0].mxu0
        %v1124 = vadd.f32 0.0, %v1123
        %v1125 = vpop.f32.mrb[0].mxu0
        %v1126 = vadd.f32 0.0, %v1125
        %v1127 = vpop.f32.mrb[0].mxu0
        %v1128 = vadd.f32 0.0, %v1127
        %v1129 = vpop.f32.mrb[0].mxu0
        %v1130 = vadd.f32 0.0, %v1129
        %1131 = vmatprep.mubr.bf16.mxu0 0
        %1132 = vmatmul.mubr.bf16.gmra.mrb[0].mxu0 %v369
        %v1133 = vpop.f32.mrb[0].mxu0
        %v1134 = vadd.f32 0.0, %v1133
        %v1135 = vpop.f32.mrb[0].mxu0
        %v1136 = vadd.f32 0.0, %v1135
        %v1137 = vpop.f32.mrb[0].mxu0
        %v1138 = vadd.f32 0.0, %v1137
        %v1139 = vpop.f32.mrb[0].mxu0
        %v1140 = vadd.f32 0.0, %v1139
        %1141 = vmatprep.mubr.bf16.mxu0 0
        %1142 = vmatmul.mubr.bf16.gmra.mrb[0].mxu0 %v370
        %v1143 = vpop.f32.mrb[0].mxu0
        %v1144 = vadd.f32 0.0, %v1143
        %v1145 = vpop.f32.mrb[0].mxu0
        %v1146 = vadd.f32 0.0, %v1145
        %v1147 = vpop.f32.mrb[0].mxu0
        %v1148 = vadd.f32 0.0, %v1147
        %v1149 = vpop.f32.mrb[0].mxu0
        %v1150 = vadd.f32 0.0, %v1149
        %1151 = vmatprep.mubr.bf16.mxu0 0
        %1152 = vmatmul.mubr.bf16.gmra.mrb[0].mxu0 %v371
        %v1153 = vpop.f32.mrb[0].mxu0
        %v1154 = vadd.f32 0.0, %v1153
        %v1155 = vpop.f32.mrb[0].mxu0
        %v1156 = vadd.f32 0.0, %v1155
        %v1157 = vpop.f32.mrb[0].mxu0
        %v1158 = vadd.f32 0.0, %v1157
        %v1159 = vpop.f32.mrb[0].mxu0
        %v1160 = vadd.f32 0.0, %v1159
        %1161 = vmatprep.mubr.bf16.mxu0 0
        %1162 = vmatmul.mubr.bf16.gmra.mrb[0].mxu0 %v372
        %v1163 = vpop.f32.mrb[0].mxu0
        %v1164 = vadd.f32 0.0, %v1163
        %v1165 = vpop.f32.mrb[0].mxu0
        %v1166 = vadd.f32 0.0, %v1165
        %v1167 = vpop.f32.mrb[0].mxu0
        %v1168 = vadd.f32 0.0, %v1167
        %v1169 = vpop.f32.mrb[0].mxu0
        %v1170 = vadd.f32 0.0, %v1169
        %1171 = vmatprep.mubr.bf16.mxu0 0
        %1172 = vmatmul.mubr.bf16.gmra.mrb[0].mxu0 %v373
        %v1173 = vpop.f32.mrb[0].mxu0
        %v1174 = vadd.f32 0.0, %v1173
        %v1175 = vpop.f32.mrb[0].mxu0
        %v1176 = vadd.f32 0.0, %v1175
        %v1177 = vpop.f32.mrb[0].mxu0
        %v1178 = vadd.f32 0.0, %v1177
        %v1179 = vpop.f32.mrb[0].mxu0
        %v1180 = vadd.f32 0.0, %v1179
        %1181 = vmatprep.mubr.bf16.mxu0 0
        %1182 = vmatmul.mubr.bf16.gmra.mrb[0].mxu0 %v374
        %v1183 = vpop.f32.mrb[0].mxu0
        %v1184 = vadd.f32 0.0, %v1183
        %v1185 = vpop.f32.mrb[0].mxu0
        %v1186 = vadd.f32 0.0, %v1185
        %v1187 = vpop.f32.mrb[0].mxu0
        %v1188 = vadd.f32 0.0, %v1187
        %v1189 = vpop.f32.mrb[0].mxu0
        %v1190 = vadd.f32 0.0, %v1189
        %1191 = vmatprep.mubr.bf16.mxu0 0
        %1192 = vmatmul.mubr.bf16.gmra.mrb[0].mxu0 %v375
        %v1193 = vpop.f32.mrb[0].mxu0
        %v1194 = vadd.f32 0.0, %v1193
        %v1195 = vpop.f32.mrb[0].mxu0
        %v1196 = vadd.f32 0.0, %v1195
        %v1197 = vpop.f32.mrb[0].mxu0
        %v1198 = vadd.f32 0.0, %v1197
        %v1199 = vpop.f32.mrb[0].mxu0
        %v1200 = vadd.f32 0.0, %v1199
        %1201 = vmatprep.mubr.bf16.mxu0 0
        %1202 = vmatmul.mubr.bf16.gmra.mrb[0].mxu0 %v376
        %v1203 = vpop.f32.mrb[0].mxu0
        %v1204 = vadd.f32 0.0, %v1203
        %v1205 = vpop.f32.mrb[0].mxu0
        %v1206 = vadd.f32 0.0, %v1205
        %v1207 = vpop.f32.mrb[0].mxu0
        %v1208 = vadd.f32 0.0, %v1207
        %v1209 = vpop.f32.mrb[0].mxu0
        %v1210 = vadd.f32 0.0, %v1209
        %1211 = vdwg.mxu0
        %v1212 = vpack.c.bf16 %v672, %v668
        %v1213 = vpack.c.bf16 %v674, %v670
        %v1214 = vpack.c.bf16 %v865, %v861
        %v1215 = vpack.c.bf16 %v867, %v863
        %v1216 = vpack.c.bf16 %v1058, %v1054
        %v1217 = vpack.c.bf16 %v1060, %v1056
        %v1218 = vpack.c.bf16 %v682, %v678
        %v1219 = vpack.c.bf16 %v684, %v680
        %v1220 = vpack.c.bf16 %v875, %v871
        %v1221 = vpack.c.bf16 %v877, %v873
        %v1222 = vpack.c.bf16 %v1068, %v1064
        %v1223 = vpack.c.bf16 %v1070, %v1066
        %v1224 = vpack.c.bf16 %v692, %v688
        %v1225 = vpack.c.bf16 %v694, %v690
        %v1226 = vpack.c.bf16 %v885, %v881
        %v1227 = vpack.c.bf16 %v887, %v883
        %v1228 = vpack.c.bf16 %v1078, %v1074
        %v1229 = vpack.c.bf16 %v1080, %v1076
        %v1230 = vpack.c.bf16 %v702, %v698
        %v1231 = vpack.c.bf16 %v704, %v700
        %v1232 = vpack.c.bf16 %v895, %v891
        %v1233 = vpack.c.bf16 %v897, %v893
        %v1234 = vpack.c.bf16 %v1088, %v1084
        %v1235 = vpack.c.bf16 %v1090, %v1086
        %v1236 = vpack.c.bf16 %v712, %v708
        %v1237 = vpack.c.bf16 %v714, %v710
        %v1238 = vpack.c.bf16 %v905, %v901
        %v1239 = vpack.c.bf16 %v907, %v903
        %v1240 = vpack.c.bf16 %v1098, %v1094
        %v1241 = vpack.c.bf16 %v1100, %v1096
        %v1242 = vpack.c.bf16 %v722, %v718
        %v1243 = vpack.c.bf16 %v724, %v720
        %v1244 = vpack.c.bf16 %v915, %v911
        %v1245 = vpack.c.bf16 %v917, %v913
        %v1246 = vpack.c.bf16 %v1108, %v1104
        %v1247 = vpack.c.bf16 %v1110, %v1106
        %v1248 = vpack.c.bf16 %v732, %v728
        %v1249 = vpack.c.bf16 %v734, %v730
        %v1250 = vpack.c.bf16 %v925, %v921
        %v1251 = vpack.c.bf16 %v927, %v923
        %v1252 = vpack.c.bf16 %v1118, %v1114
        %v1253 = vpack.c.bf16 %v1120, %v1116
        %v1254 = vpack.c.bf16 %v742, %v738
        %v1255 = vpack.c.bf16 %v744, %v740
        %v1256 = vpack.c.bf16 %v935, %v931
        %v1257 = vpack.c.bf16 %v937, %v933
        %v1258 = vpack.c.bf16 %v1128, %v1124
        %v1259 = vpack.c.bf16 %v1130, %v1126
        %v1260 = vpack.c.bf16 %v752, %v748
        %v1261 = vpack.c.bf16 %v754, %v750
        %v1262 = vpack.c.bf16 %v945, %v941
        %v1263 = vpack.c.bf16 %v947, %v943
        %v1264 = vpack.c.bf16 %v1138, %v1134
        %v1265 = vpack.c.bf16 %v1140, %v1136
        %v1266 = vpack.c.bf16 %v762, %v758
        %v1267 = vpack.c.bf16 %v764, %v760
        %v1268 = vpack.c.bf16 %v955, %v951
        %v1269 = vpack.c.bf16 %v957, %v953
        %v1270 = vpack.c.bf16 %v1148, %v1144
        %v1271 = vpack.c.bf16 %v1150, %v1146
        %v1272 = vpack.c.bf16 %v772, %v768
        %v1273 = vpack.c.bf16 %v774, %v770
        %v1274 = vpack.c.bf16 %v965, %v961
        %v1275 = vpack.c.bf16 %v967, %v963
        %v1276 = vpack.c.bf16 %v1158, %v1154
        %v1277 = vpack.c.bf16 %v1160, %v1156
        %v1278 = vpack.c.bf16 %v782, %v778
        %v1279 = vpack.c.bf16 %v784, %v780
        %v1280 = vpack.c.bf16 %v975, %v971
        %v1281 = vpack.c.bf16 %v977, %v973
        %v1282 = vpack.c.bf16 %v1168, %v1164
        %v1283 = vpack.c.bf16 %v1170, %v1166
        %v1284 = vpack.c.bf16 %v792, %v788
        %v1285 = vpack.c.bf16 %v794, %v790
        %v1286 = vpack.c.bf16 %v985, %v981
        %v1287 = vpack.c.bf16 %v987, %v983
        %v1288 = vpack.c.bf16 %v1178, %v1174
        %v1289 = vpack.c.bf16 %v1180, %v1176
        %v1290 = vpack.c.bf16 %v802, %v798
        %v1291 = vpack.c.bf16 %v804, %v800
        %v1292 = vpack.c.bf16 %v995, %v991
        %v1293 = vpack.c.bf16 %v997, %v993
        %v1294 = vpack.c.bf16 %v1188, %v1184
        %v1295 = vpack.c.bf16 %v1190, %v1186
        %v1296 = vpack.c.bf16 %v812, %v808
        %v1297 = vpack.c.bf16 %v814, %v810
        %v1298 = vpack.c.bf16 %v1005, %v1001
        %v1299 = vpack.c.bf16 %v1007, %v1003
        %v1300 = vpack.c.bf16 %v1198, %v1194
        %v1301 = vpack.c.bf16 %v1200, %v1196
        %v1302 = vpack.c.bf16 %v822, %v818
        %v1303 = vpack.c.bf16 %v824, %v820
        %v1304 = vpack.c.bf16 %v1015, %v1011
        %v1305 = vpack.c.bf16 %v1017, %v1013
        %v1306 = vpack.c.bf16 %v1208, %v1204
        %v1307 = vpack.c.bf16 %v1210, %v1206
        %v1404 = vunpack.c.l.b16 %v1212
        %v1405 = vunpack.c.l.b16 %v1213
        %v1406 = vunpack.c.l.b16 %v1214
        %v1407 = vunpack.c.l.b16 %v1215
        %v1408 = vunpack.c.l.b16 %v1216
        %v1409 = vunpack.c.l.b16 %v1217
        %v1410 = vunpack.c.h.b16 %v1212
        %v1411 = vunpack.c.h.b16 %v1213
        %v1412 = vunpack.c.h.b16 %v1214
        %v1413 = vunpack.c.h.b16 %v1215
        %v1414 = vunpack.c.h.b16 %v1216
        %v1415 = vunpack.c.h.b16 %v1217
        %v1416 = vunpack.c.l.b16 %v1218
        %v1417 = vunpack.c.l.b16 %v1219
        %v1418 = vunpack.c.l.b16 %v1220
        %v1419 = vunpack.c.l.b16 %v1221
        %v1420 = vunpack.c.l.b16 %v1222
        %v1421 = vunpack.c.l.b16 %v1223
        %v1422 = vunpack.c.h.b16 %v1218
        %v1423 = vunpack.c.h.b16 %v1219
        %v1424 = vunpack.c.h.b16 %v1220
        %v1425 = vunpack.c.h.b16 %v1221
        %v1426 = vunpack.c.h.b16 %v1222
        %v1427 = vunpack.c.h.b16 %v1223
        %v1428 = vunpack.c.l.b16 %v1224
        %v1429 = vunpack.c.l.b16 %v1225
        %v1430 = vunpack.c.l.b16 %v1226
        %v1431 = vunpack.c.l.b16 %v1227
        %v1432 = vunpack.c.l.b16 %v1228
        %v1433 = vunpack.c.l.b16 %v1229
        %v1434 = vunpack.c.h.b16 %v1224
        %v1435 = vunpack.c.h.b16 %v1225
        %v1436 = vunpack.c.h.b16 %v1226
        %v1437 = vunpack.c.h.b16 %v1227
        %v1438 = vunpack.c.h.b16 %v1228
        %v1439 = vunpack.c.h.b16 %v1229
        %v1440 = vunpack.c.l.b16 %v1230
        %v1441 = vunpack.c.l.b16 %v1231
        %v1442 = vunpack.c.l.b16 %v1232
        %v1443 = vunpack.c.l.b16 %v1233
        %v1444 = vunpack.c.l.b16 %v1234
        %v1445 = vunpack.c.l.b16 %v1235
        %v1446 = vunpack.c.h.b16 %v1230
        %v1447 = vunpack.c.h.b16 %v1231
        %v1448 = vunpack.c.h.b16 %v1232
        %v1449 = vunpack.c.h.b16 %v1233
        %v1450 = vunpack.c.h.b16 %v1234
        %v1451 = vunpack.c.h.b16 %v1235
        %v1452 = vunpack.c.l.b16 %v1236
        %v1453 = vunpack.c.l.b16 %v1237
        %v1454 = vunpack.c.l.b16 %v1238
        %v1455 = vunpack.c.l.b16 %v1239
        %v1456 = vunpack.c.l.b16 %v1240
        %v1457 = vunpack.c.l.b16 %v1241
        %v1458 = vunpack.c.h.b16 %v1236
        %v1459 = vunpack.c.h.b16 %v1237
        %v1460 = vunpack.c.h.b16 %v1238
        %v1461 = vunpack.c.h.b16 %v1239
        %v1462 = vunpack.c.h.b16 %v1240
        %v1463 = vunpack.c.h.b16 %v1241
        %v1464 = vunpack.c.l.b16 %v1242
        %v1465 = vunpack.c.l.b16 %v1243
        %v1466 = vunpack.c.l.b16 %v1244
        %v1467 = vunpack.c.l.b16 %v1245
        %v1468 = vunpack.c.l.b16 %v1246
        %v1469 = vunpack.c.l.b16 %v1247
        %v1470 = vunpack.c.h.b16 %v1242
        %v1471 = vunpack.c.h.b16 %v1243
        %v1472 = vunpack.c.h.b16 %v1244
        %v1473 = vunpack.c.h.b16 %v1245
        %v1474 = vunpack.c.h.b16 %v1246
        %v1475 = vunpack.c.h.b16 %v1247
        %v1476 = vunpack.c.l.b16 %v1248
        %v1477 = vunpack.c.l.b16 %v1249
        %v1478 = vunpack.c.l.b16 %v1250
        %v1479 = vunpack.c.l.b16 %v1251
        %v1480 = vunpack.c.l.b16 %v1252
        %v1481 = vunpack.c.l.b16 %v1253
        %v1482 = vunpack.c.h.b16 %v1248
        %v1483 = vunpack.c.h.b16 %v1249
        %v1484 = vunpack.c.h.b16 %v1250
        %v1485 = vunpack.c.h.b16 %v1251
        %v1486 = vunpack.c.h.b16 %v1252
        %v1487 = vunpack.c.h.b16 %v1253
        %v1488 = vunpack.c.l.b16 %v1254
        %v1489 = vunpack.c.l.b16 %v1255
        %v1490 = vunpack.c.l.b16 %v1256
        %v1491 = vunpack.c.l.b16 %v1257
        %v1492 = vunpack.c.l.b16 %v1258
        %v1493 = vunpack.c.l.b16 %v1259
        %v1494 = vunpack.c.h.b16 %v1254
        %v1495 = vunpack.c.h.b16 %v1255
        %v1496 = vunpack.c.h.b16 %v1256
        %v1497 = vunpack.c.h.b16 %v1257
        %v1498 = vunpack.c.h.b16 %v1258
        %v1499 = vunpack.c.h.b16 %v1259
        %v1500 = vunpack.c.l.b16 %v1260
        %v1501 = vunpack.c.l.b16 %v1261
        %v1502 = vunpack.c.l.b16 %v1262
        %v1503 = vunpack.c.l.b16 %v1263
        %v1504 = vunpack.c.l.b16 %v1264
        %v1505 = vunpack.c.l.b16 %v1265
        %v1506 = vunpack.c.h.b16 %v1260
        %v1507 = vunpack.c.h.b16 %v1261
        %v1508 = vunpack.c.h.b16 %v1262
        %v1509 = vunpack.c.h.b16 %v1263
        %v1510 = vunpack.c.h.b16 %v1264
        %v1511 = vunpack.c.h.b16 %v1265
        %v1512 = vunpack.c.l.b16 %v1266
        %v1513 = vunpack.c.l.b16 %v1267
        %v1514 = vunpack.c.l.b16 %v1268
        %v1515 = vunpack.c.l.b16 %v1269
        %v1516 = vunpack.c.l.b16 %v1270
        %v1517 = vunpack.c.l.b16 %v1271
        %v1518 = vunpack.c.h.b16 %v1266
        %v1519 = vunpack.c.h.b16 %v1267
        %v1520 = vunpack.c.h.b16 %v1268
        %v1521 = vunpack.c.h.b16 %v1269
        %v1522 = vunpack.c.h.b16 %v1270
        %v1523 = vunpack.c.h.b16 %v1271
        %v1524 = vunpack.c.l.b16 %v1272
        %v1525 = vunpack.c.l.b16 %v1273
        %v1526 = vunpack.c.l.b16 %v1274
        %v1527 = vunpack.c.l.b16 %v1275
        %v1528 = vunpack.c.l.b16 %v1276
        %v1529 = vunpack.c.l.b16 %v1277
        %v1530 = vunpack.c.h.b16 %v1272
        %v1531 = vunpack.c.h.b16 %v1273
        %v1532 = vunpack.c.h.b16 %v1274
        %v1533 = vunpack.c.h.b16 %v1275
        %v1534 = vunpack.c.h.b16 %v1276
        %v1535 = vunpack.c.h.b16 %v1277
        %v1536 = vunpack.c.l.b16 %v1278
        %v1537 = vunpack.c.l.b16 %v1279
        %v1538 = vunpack.c.l.b16 %v1280
        %v1539 = vunpack.c.l.b16 %v1281
        %v1540 = vunpack.c.l.b16 %v1282
        %v1541 = vunpack.c.l.b16 %v1283
        %v1542 = vunpack.c.h.b16 %v1278
        %v1543 = vunpack.c.h.b16 %v1279
        %v1544 = vunpack.c.h.b16 %v1280
        %v1545 = vunpack.c.h.b16 %v1281
        %v1546 = vunpack.c.h.b16 %v1282
        %v1547 = vunpack.c.h.b16 %v1283
        %v1548 = vunpack.c.l.b16 %v1284
        %v1549 = vunpack.c.l.b16 %v1285
        %v1550 = vunpack.c.l.b16 %v1286
        %v1551 = vunpack.c.l.b16 %v1287
        %v1552 = vunpack.c.l.b16 %v1288
        %v1553 = vunpack.c.l.b16 %v1289
        %v1554 = vunpack.c.h.b16 %v1284
        %v1555 = vunpack.c.h.b16 %v1285
        %v1556 = vunpack.c.h.b16 %v1286
        %v1557 = vunpack.c.h.b16 %v1287
        %v1558 = vunpack.c.h.b16 %v1288
        %v1559 = vunpack.c.h.b16 %v1289
        %v1560 = vunpack.c.l.b16 %v1290
        %v1561 = vunpack.c.l.b16 %v1291
        %v1562 = vunpack.c.l.b16 %v1292
        %v1563 = vunpack.c.l.b16 %v1293
        %v1564 = vunpack.c.l.b16 %v1294
        %v1565 = vunpack.c.l.b16 %v1295
        %v1566 = vunpack.c.h.b16 %v1290
        %v1567 = vunpack.c.h.b16 %v1291
        %v1568 = vunpack.c.h.b16 %v1292
        %v1569 = vunpack.c.h.b16 %v1293
        %v1570 = vunpack.c.h.b16 %v1294
        %v1571 = vunpack.c.h.b16 %v1295
        %v1572 = vunpack.c.l.b16 %v1296
        %v1573 = vunpack.c.l.b16 %v1297
        %v1574 = vunpack.c.l.b16 %v1298
        %v1575 = vunpack.c.l.b16 %v1299
        %v1576 = vunpack.c.l.b16 %v1300
        %v1577 = vunpack.c.l.b16 %v1301
        %v1578 = vunpack.c.h.b16 %v1296
        %v1579 = vunpack.c.h.b16 %v1297
        %v1580 = vunpack.c.h.b16 %v1298
        %v1581 = vunpack.c.h.b16 %v1299
        %v1582 = vunpack.c.h.b16 %v1300
        %v1583 = vunpack.c.h.b16 %v1301
        %v1584 = vunpack.c.l.b16 %v1302
        %v1585 = vunpack.c.l.b16 %v1303
        %v1586 = vunpack.c.l.b16 %v1304
        %v1587 = vunpack.c.l.b16 %v1305
        %v1588 = vunpack.c.l.b16 %v1306
        %v1589 = vunpack.c.l.b16 %v1307
        %v1590 = vunpack.c.h.b16 %v1302
        %v1591 = vunpack.c.h.b16 %v1303
        %v1592 = vunpack.c.h.b16 %v1304
        %v1593 = vunpack.c.h.b16 %v1305
        %v1594 = vunpack.c.h.b16 %v1306
        %v1595 = vunpack.c.h.b16 %v1307
        %v1596 = vpack.c.b16 %v1405, %v1404
        %v1597 = vpack.c.b16 %v1407, %v1406
        %v1598 = vpack.c.b16 %v1409, %v1408
        %v1599 = vpack.c.b16 %v1411, %v1410
        %v1600 = vpack.c.b16 %v1413, %v1412
        %v1601 = vpack.c.b16 %v1415, %v1414
        %v1602 = vpack.c.b16 %v1417, %v1416
        %v1603 = vpack.c.b16 %v1419, %v1418
        %v1604 = vpack.c.b16 %v1421, %v1420
        %v1605 = vpack.c.b16 %v1423, %v1422
        %v1606 = vpack.c.b16 %v1425, %v1424
        %v1607 = vpack.c.b16 %v1427, %v1426
        %v1608 = vpack.c.b16 %v1429, %v1428
        %v1609 = vpack.c.b16 %v1431, %v1430
        %v1610 = vpack.c.b16 %v1433, %v1432
        %v1611 = vpack.c.b16 %v1435, %v1434
        %v1612 = vpack.c.b16 %v1437, %v1436
        %v1613 = vpack.c.b16 %v1439, %v1438
        %v1614 = vpack.c.b16 %v1441, %v1440
        %v1615 = vpack.c.b16 %v1443, %v1442
        %v1616 = vpack.c.b16 %v1445, %v1444
        %v1617 = vpack.c.b16 %v1447, %v1446
        %v1618 = vpack.c.b16 %v1449, %v1448
        %v1619 = vpack.c.b16 %v1451, %v1450
        %v1620 = vpack.c.b16 %v1453, %v1452
        %v1621 = vpack.c.b16 %v1455, %v1454
        %v1622 = vpack.c.b16 %v1457, %v1456
        %v1623 = vpack.c.b16 %v1459, %v1458
        %v1624 = vpack.c.b16 %v1461, %v1460
        %v1625 = vpack.c.b16 %v1463, %v1462
        %v1626 = vpack.c.b16 %v1465, %v1464
        %v1627 = vpack.c.b16 %v1467, %v1466
        %v1628 = vpack.c.b16 %v1469, %v1468
        %v1629 = vpack.c.b16 %v1471, %v1470
        %v1630 = vpack.c.b16 %v1473, %v1472
        %v1631 = vpack.c.b16 %v1475, %v1474
        %v1632 = vpack.c.b16 %v1477, %v1476
        %v1633 = vpack.c.b16 %v1479, %v1478
        %v1634 = vpack.c.b16 %v1481, %v1480
        %v1635 = vpack.c.b16 %v1483, %v1482
        %v1636 = vpack.c.b16 %v1485, %v1484
        %v1637 = vpack.c.b16 %v1487, %v1486
        %v1638 = vpack.c.b16 %v1489, %v1488
        %v1639 = vpack.c.b16 %v1491, %v1490
        %v1640 = vpack.c.b16 %v1493, %v1492
        %v1641 = vpack.c.b16 %v1495, %v1494
        %v1642 = vpack.c.b16 %v1497, %v1496
        %v1643 = vpack.c.b16 %v1499, %v1498
        %v1644 = vpack.c.b16 %v1501, %v1500
        %v1645 = vpack.c.b16 %v1503, %v1502
        %v1646 = vpack.c.b16 %v1505, %v1504
        %v1647 = vpack.c.b16 %v1507, %v1506
        %v1648 = vpack.c.b16 %v1509, %v1508
        %v1649 = vpack.c.b16 %v1511, %v1510
        %v1650 = vpack.c.b16 %v1513, %v1512
        %v1651 = vpack.c.b16 %v1515, %v1514
        %v1652 = vpack.c.b16 %v1517, %v1516
        %v1653 = vpack.c.b16 %v1519, %v1518
        %v1654 = vpack.c.b16 %v1521, %v1520
        %v1655 = vpack.c.b16 %v1523, %v1522
        %v1656 = vpack.c.b16 %v1525, %v1524
        %v1657 = vpack.c.b16 %v1527, %v1526
        %v1658 = vpack.c.b16 %v1529, %v1528
        %v1659 = vpack.c.b16 %v1531, %v1530
        %v1660 = vpack.c.b16 %v1533, %v1532
        %v1661 = vpack.c.b16 %v1535, %v1534
        %v1662 = vpack.c.b16 %v1537, %v1536
        %v1663 = vpack.c.b16 %v1539, %v1538
        %v1664 = vpack.c.b16 %v1541, %v1540
        %v1665 = vpack.c.b16 %v1543, %v1542
        %v1666 = vpack.c.b16 %v1545, %v1544
        %v1667 = vpack.c.b16 %v1547, %v1546
        %v1668 = vpack.c.b16 %v1549, %v1548
        %v1669 = vpack.c.b16 %v1551, %v1550
        %v1670 = vpack.c.b16 %v1553, %v1552
        %v1671 = vpack.c.b16 %v1555, %v1554
        %v1672 = vpack.c.b16 %v1557, %v1556
        %v1673 = vpack.c.b16 %v1559, %v1558
        %v1674 = vpack.c.b16 %v1561, %v1560
        %v1675 = vpack.c.b16 %v1563, %v1562
        %v1676 = vpack.c.b16 %v1565, %v1564
        %v1677 = vpack.c.b16 %v1567, %v1566
        %v1678 = vpack.c.b16 %v1569, %v1568
        %v1679 = vpack.c.b16 %v1571, %v1570
        %v1680 = vpack.c.b16 %v1573, %v1572
        %v1681 = vpack.c.b16 %v1575, %v1574
        %v1682 = vpack.c.b16 %v1577, %v1576
        %v1683 = vpack.c.b16 %v1579, %v1578
        %v1684 = vpack.c.b16 %v1581, %v1580
        %v1685 = vpack.c.b16 %v1583, %v1582
        %v1686 = vpack.c.b16 %v1585, %v1584
        %v1687 = vpack.c.b16 %v1587, %v1586
        %v1688 = vpack.c.b16 %v1589, %v1588
        %v1689 = vpack.c.b16 %v1591, %v1590
        %v1690 = vpack.c.b16 %v1593, %v1592
        %v1691 = vpack.c.b16 %v1595, %v1594
        %1788 = vst [vmem:[%s211] sm:$0xff] %v1596
        %1789 = vst [vmem:[%s211 + $0x8] sm:$0xff] %v1597
        %1790 = vst [vmem:[%s211 + $0x10] sm:$0xff] %v1598
        %1791 = vst [vmem:[%s211 + $0x18] sm:$0xff] %v1599
        %1792 = vst [vmem:[%s211 + $0x20] sm:$0xff] %v1600
        %1793 = vst [vmem:[%s211 + $0x28] sm:$0xff] %v1601
        %1794 = vst [vmem:[%s211 + $0x30] sm:$0xff] %v1602
        %1795 = vst [vmem:[%s211 + $0x38] sm:$0xff] %v1603
        %1796 = vst [vmem:[%s211 + $0x40] sm:$0xff] %v1604
        %1797 = vst [vmem:[%s211 + $0x48] sm:$0xff] %v1605
        %1798 = vst [vmem:[%s211 + $0x50] sm:$0xff] %v1606
        %1799 = vst [vmem:[%s211 + $0x58] sm:$0xff] %v1607
        %1800 = vst [vmem:[%s211 + $0x60] sm:$0xff] %v1608
        %1801 = vst [vmem:[%s211 + $0x68] sm:$0xff] %v1609
        %1802 = vst [vmem:[%s211 + $0x70] sm:$0xff] %v1610
        %1803 = vst [vmem:[%s211 + $0x78] sm:$0xff] %v1611
        %1804 = vst [vmem:[%s211 + $0x80] sm:$0xff] %v1612
        %1805 = vst [vmem:[%s211 + $0x88] sm:$0xff] %v1613
        %1806 = vst [vmem:[%s211 + $0x90] sm:$0xff] %v1614
        %1807 = vst [vmem:[%s211 + $0x98] sm:$0xff] %v1615
        %1808 = vst [vmem:[%s211 + $0xa0] sm:$0xff] %v1616
        %1809 = vst [vmem:[%s211 + $0xa8] sm:$0xff] %v1617
        %1810 = vst [vmem:[%s211 + $0xb0] sm:$0xff] %v1618
        %1811 = vst [vmem:[%s211 + $0xb8] sm:$0xff] %v1619
        %1812 = vst [vmem:[%s211 + $0xc0] sm:$0xff] %v1620
        %1813 = vst [vmem:[%s211 + $0xc8] sm:$0xff] %v1621
        %1814 = vst [vmem:[%s211 + $0xd0] sm:$0xff] %v1622
        %1815 = vst [vmem:[%s211 + $0xd8] sm:$0xff] %v1623
        %1816 = vst [vmem:[%s211 + $0xe0] sm:$0xff] %v1624
        %1817 = vst [vmem:[%s211 + $0xe8] sm:$0xff] %v1625
        %1818 = vst [vmem:[%s211 + $0xf0] sm:$0xff] %v1626
        %1819 = vst [vmem:[%s211 + $0xf8] sm:$0xff] %v1627
        %1820 = vst [vmem:[%s211 + $0x100] sm:$0xff] %v1628
        %1821 = vst [vmem:[%s211 + $0x108] sm:$0xff] %v1629
        %1822 = vst [vmem:[%s211 + $0x110] sm:$0xff] %v1630
        %1823 = vst [vmem:[%s211 + $0x118] sm:$0xff] %v1631
        %1824 = vst [vmem:[%s211 + $0x120] sm:$0xff] %v1632
        %1825 = vst [vmem:[%s211 + $0x128] sm:$0xff] %v1633
        %1826 = vst [vmem:[%s211 + $0x130] sm:$0xff] %v1634
        %1827 = vst [vmem:[%s211 + $0x138] sm:$0xff] %v1635
        %1828 = vst [vmem:[%s211 + $0x140] sm:$0xff] %v1636
        %1829 = vst [vmem:[%s211 + $0x148] sm:$0xff] %v1637
        %1830 = vst [vmem:[%s211 + $0x150] sm:$0xff] %v1638
        %1831 = vst [vmem:[%s211 + $0x158] sm:$0xff] %v1639
        %1832 = vst [vmem:[%s211 + $0x160] sm:$0xff] %v1640
        %1833 = vst [vmem:[%s211 + $0x168] sm:$0xff] %v1641
        %1834 = vst [vmem:[%s211 + $0x170] sm:$0xff] %v1642
        %1835 = vst [vmem:[%s211 + $0x178] sm:$0xff] %v1643
        %1836 = vst [vmem:[%s211 + $0x180] sm:$0xff] %v1644
        %1837 = vst [vmem:[%s211 + $0x188] sm:$0xff] %v1645
        %1838 = vst [vmem:[%s211 + $0x190] sm:$0xff] %v1646
        %1839 = vst [vmem:[%s211 + $0x198] sm:$0xff] %v1647
        %1840 = vst [vmem:[%s211 + $0x1a0] sm:$0xff] %v1648
        %1841 = vst [vmem:[%s211 + $0x1a8] sm:$0xff] %v1649
        %1842 = vst [vmem:[%s211 + $0x1b0] sm:$0xff] %v1650
        %1843 = vst [vmem:[%s211 + $0x1b8] sm:$0xff] %v1651
        %1844 = vst [vmem:[%s211 + $0x1c0] sm:$0xff] %v1652
        %1845 = vst [vmem:[%s211 + $0x1c8] sm:$0xff] %v1653
        %1846 = vst [vmem:[%s211 + $0x1d0] sm:$0xff] %v1654
        %1847 = vst [vmem:[%s211 + $0x1d8] sm:$0xff] %v1655
        %1848 = vst [vmem:[%s211 + $0x1e0] sm:$0xff] %v1656
        %1849 = vst [vmem:[%s211 + $0x1e8] sm:$0xff] %v1657
        %1850 = vst [vmem:[%s211 + $0x1f0] sm:$0xff] %v1658
        %1851 = vst [vmem:[%s211 + $0x1f8] sm:$0xff] %v1659
        %1852 = vst [vmem:[%s211 + $0x200] sm:$0xff] %v1660
        %1853 = vst [vmem:[%s211 + $0x208] sm:$0xff] %v1661
        %1854 = vst [vmem:[%s211 + $0x210] sm:$0xff] %v1662
        %1855 = vst [vmem:[%s211 + $0x218] sm:$0xff] %v1663
        %1856 = vst [vmem:[%s211 + $0x220] sm:$0xff] %v1664
        %1857 = vst [vmem:[%s211 + $0x228] sm:$0xff] %v1665
        %1858 = vst [vmem:[%s211 + $0x230] sm:$0xff] %v1666
        %1859 = vst [vmem:[%s211 + $0x238] sm:$0xff] %v1667
        %1860 = vst [vmem:[%s211 + $0x240] sm:$0xff] %v1668
        %1861 = vst [vmem:[%s211 + $0x248] sm:$0xff] %v1669
        %1862 = vst [vmem:[%s211 + $0x250] sm:$0xff] %v1670
        %1863 = vst [vmem:[%s211 + $0x258] sm:$0xff] %v1671
        %1864 = vst [vmem:[%s211 + $0x260] sm:$0xff] %v1672
        %1865 = vst [vmem:[%s211 + $0x268] sm:$0xff] %v1673
        %1866 = vst [vmem:[%s211 + $0x270] sm:$0xff] %v1674
        %1867 = vst [vmem:[%s211 + $0x278] sm:$0xff] %v1675
        %1868 = vst [vmem:[%s211 + $0x280] sm:$0xff] %v1676
        %1869 = vst [vmem:[%s211 + $0x288] sm:$0xff] %v1677
        %1870 = vst [vmem:[%s211 + $0x290] sm:$0xff] %v1678
        %1871 = vst [vmem:[%s211 + $0x298] sm:$0xff] %v1679
        %1872 = vst [vmem:[%s211 + $0x2a0] sm:$0xff] %v1680
        %1873 = vst [vmem:[%s211 + $0x2a8] sm:$0xff] %v1681
        %1874 = vst [vmem:[%s211 + $0x2b0] sm:$0xff] %v1682
        %1875 = vst [vmem:[%s211 + $0x2b8] sm:$0xff] %v1683
        %1876 = vst [vmem:[%s211 + $0x2c0] sm:$0xff] %v1684
        %1877 = vst [vmem:[%s211 + $0x2c8] sm:$0xff] %v1685
        %1878 = vst [vmem:[%s211 + $0x2d0] sm:$0xff] %v1686
        %1879 = vst [vmem:[%s211 + $0x2d8] sm:$0xff] %v1687
        %1880 = vst [vmem:[%s211 + $0x2e0] sm:$0xff] %v1688
        %1881 = vst [vmem:[%s211 + $0x2e8] sm:$0xff] %v1689
        %1882 = vst [vmem:[%s211 + $0x2f0] sm:$0xff] %v1690
        %1883 = vst [vmem:[%s211 + $0x2f8] sm:$0xff] %v1691
        %s1884 = sand.u32 %s105, 1
        %s1885 = scalar_lea.sflag [#allocation4], %s1884
        %s1886 = sand.u32 %s105, 1
        %s1887 = smul.addr %s1886, 768
        %s1888 = scalar_lea.vmem [#allocation7], %s1887
        // Predicated region
        $region37: #{tpu_custom_call.1} parent=27 // pred_check
          %p1889 = pneg %p115
        $region38: #{tpu_custom_call.1} parent=27 // pred_check_branch
          %1891 = sbr.rel (%p1889) target = $region40
        $region39: #{tpu_custom_call.1} parent=27 // pred_region
          %s1892 = smul.u32 32, %s26
          %s1893 = smul.u32 6, %s27
          %s1895 = ssub.s32 12288, 12288
          %1896 = vsyncadd %s1885, %s1895
          %s1897 = smul.addr %s1892, 6
          %s1898 = sadd.s32 %s1893, %s1897
          %s1899 = smul.addr %s25, 192
          %s1900 = sadd.s32 %s1898, %s1899
          %s1901 = smul.addr %s1900, 64
          %s1902 = scalar_lea.hbm %s2, %s1901
          %s1903 = sshll.u32 %s1888, 4
          %s1904 = int_to_ptr.vmem [resolvable:$true] %s1903
          %1909 = dma.vmem_to_hbm [thread:$0]  %s1904, 12288, %s1902, %s1885, 384, 384, 24
        $region40: #{tpu_custom_call.1} parent=27 // pred_fallthru
          _
      $region28: #{tpu_custom_call.1} parent=5 // pred_fallthru
        _
      %p1910 = scmp.le.s32.totalorder 2, %s15
      // Predicated region
      $region41: #{tpu_custom_call.1} parent=5 // pred_check
        %p1911 = pneg %p1910
      $region42: #{tpu_custom_call.1} parent=5 // pred_check_branch
        %1913 = sbr.rel (%p1911) target = $region44
      $region43: #{tpu_custom_call.1} parent=5 // pred_region
        %s1914 = ssub.s32 %s15, 2
        // Predicated region
        $region45: #{tpu_custom_call.1} parent=43 // pred_check
          %p1915 = pneg %p121
        $region46: #{tpu_custom_call.1} parent=43 // pred_check_branch
          %1917 = sbr.rel (%p1915) target = $region48
        $region47: #{tpu_custom_call.1} parent=43 // pred_region
          %s1918 = sand.u32 %s106, 1
          %s1919 = scalar_lea.sflag [#allocation4], %s1918
          %s1920 = sand.u32 %s106, 1
          %s1921 = smul.addr %s1920, 768
          %s1922 = scalar_lea.vmem [#allocation7], %s1921
          %1923 = dma.done %s1919, 12288
        $region48: #{tpu_custom_call.1} parent=43 // pred_fallthru
          _
      $region44: #{tpu_custom_call.1} parent=5 // pred_fallthru
        _
    $region6: #{tpu_custom_call.1} parent=1 // loop_footer
      %s19 = sadd.s32 1, %s15
    $region7: #{tpu_custom_call.1} parent=1 // loop_footer_branch
      %14 = sbr.rel target = $region3
    $region8: #{tpu_custom_call.1} parent=1 // loop_exit
      _
    %1924 = vsyncpa [#allocation3], 1
    %s1925 = scalar_lea.sflag [#allocation3], 1
    %1926 = vsyncpa %s1925, 1
    %1927 = vsyncpa [#allocation6], 1
    %1928 = vsyncpa [#allocation4], 1
    %s1929 = scalar_lea.sflag [#allocation4], 1
    %1930 = vsyncpa %s1929, 1

</llo_original>
